<compile_context>
chip_gen: v7x
topology: tpu7x:2x2x1
jax: 0.10.0
libtpu: 0.0.40
codegen_flags: <defaults>
</compile_context>

<pallas_src>
import math

import jax
import jax.numpy as jnp
from jax import lax
from jax.experimental import pallas as pl
from jax.experimental.pallas import tpu as pltpu

_INV_SQRT2 = 1.0 / math.sqrt(2.0)

_VMEM_LIMIT = None


def _vmem_limit_bytes():
    """Per-generation scoped-VMEM limit: 3/4 of physical, capped at 96 MiB."""
    global _VMEM_LIMIT
    if _VMEM_LIMIT is None:
        cap = None
        try:
            info = pltpu.get_tpu_info()
            for attr in ("vmem_capacity_bytes", "vmem_size_bytes", "vmem_bytes"):
                v = getattr(info, attr, None)
                if v:
                    cap = int(v)
                    break
        except Exception:
            cap = None
        if cap is None:
            _VMEM_LIMIT = 48 * 1024 * 1024          # safe even on v7x (64 MiB phys)
        else:
            _VMEM_LIMIT = int(min(cap * 3 // 4, 96 * 1024 * 1024))
    return _VMEM_LIMIT


def _pick_row_tile(Ho, Wo, N):
    """Output-row tile th with th | Ho (no ragged tiles, no output pad/slice).

    Targets large MXU row tiles (th*Wo <= 1024 rows) while keeping at least two
    total grid steps so both v7x TensorCores get work.
    """
    max_rows = 1024
    th = 1
    for d in range(1, Ho + 1):
        if Ho % d == 0 and d * Wo <= max_rows:
            th = d
    if N * (Ho // th) < 2:            # single-step grid -> split rows if possible
        for d in range(th - 1, 0, -1):
            if Ho % d == 0:
                th = d
                break
    return th


# ---------------------------------------------------------------------------
# Pallas kernel: fused 9-tap conv(3x3, stride 2, pad 1) + bias + exact-erf GELU.
#   x_ref : (4, Ho+1, Wo+1, C)  bf16  parity-split zero-padded input (one image)
#   w_ref : (9, C, Cout)        bf16  per-tap weight matrices (resident)
#   b_ref : (1, Cout)           f32   bias (resident)
#   o_ref : (th, Wo, Cout)      bf16  output row tile
# ---------------------------------------------------------------------------
def _conv3x3s2_gelu_kernel(x_ref, w_ref, b_ref, o_ref):
    th, Wo, Cout = o_ref.shape
    C = x_ref.shape[-1]
    r0 = pl.program_id(1) * th                     # first output row of this tile

    acc = jnp.zeros((th * Wo, Cout), jnp.float32)
    for ky in range(3):
        for kx in range(3):
            p = 2 * (ky % 2) + (kx % 2)            # parity slab holding this tap
            xt = x_ref[p, pl.ds(r0 + ky // 2, th), pl.ds(kx // 2, Wo), :]
            acc = acc + jnp.dot(xt.reshape(th * Wo, C), w_ref[3 * ky + kx],
                                preferred_element_type=jnp.float32)
    acc = acc + b_ref[...]
    # Exact GELU (erf form) to match torch.nn.GELU() default semantics.
    acc = 0.5 * acc * (1.0 + lax.erf(acc * _INV_SQRT2))
    o_ref[...] = acc.reshape(th, Wo, Cout).astype(o_ref.dtype)


# ---------------------------------------------------------------------------
# Conv2d(C, Cout, 3, stride=2, padding=1) + GELU.  NHWC in, NHWC bf16 out.
# ---------------------------------------------------------------------------
def _conv3x3_s2_gelu_nhwc(x_nhwc, weight_oihw, bias):
    N, H, W, C = x_nhwc.shape
    Cout = weight_oihw.shape[0]
    Ho, Wo = (H + 1) // 2, (W + 1) // 2
    Hop, Wop = Ho + 1, Wo + 1

    # Zero-pad and split into the 4 (row, col) parities.  Every stride-2 tap then
    # becomes a contiguous (th, Wo, C) window of one parity slab, so the kernel
    # never needs strided loads and XLA never materializes im2col patches.
    xp = jnp.pad(x_nhwc.astype(jnp.bfloat16), ((0, 0), (1, 1), (1, 1), (0, 0)))

    def parity(pr, pc):
        s = xp[:, pr::2, pc::2, :][:, :Hop, :Wop, :]
        return jnp.pad(s, ((0, 0), (0, Hop - s.shape[1]),
                           (0, Wop - s.shape[2]), (0, 0)))

    xpar = jnp.stack([parity(pr, pc) for pr in (0, 1) for pc in (0, 1)], axis=1)
    # xpar: (N, 4, Hop, Wop, C) bf16 — the only pre-kernel copy (~1x input bytes).

    # (Cout, Cin, 3, 3) -> (3, 3, Cin, Cout) -> (9, Cin, Cout); no Cout padding.
    w_taps = (jnp.transpose(weight_oihw, (2, 3, 1, 0))
              .reshape(9, C, Cout).astype(jnp.bfloat16))
    b_row = bias.astype(jnp.float32).reshape(1, Cout)

    th = _pick_row_tile(Ho, Wo, N)
    nt = Ho // th

    return pl.pallas_call(
        _conv3x3s2_gelu_kernel,
        out_shape=jax.ShapeDtypeStruct((N, Ho, Wo, Cout), jnp.bfloat16),
        grid=(N, nt),
        in_specs=[
            # Whole padded image per batch element; index map is constant in t,
            # so it is fetched once per image (per core).
            pl.BlockSpec((None, 4, Hop, Wop, C), lambda n, t: (n, 0, 0, 0, 0)),
            pl.BlockSpec((9, C, Cout), lambda n, t: (0, 0, 0)),   # resident weights
            pl.BlockSpec((1, Cout), lambda n, t: (0, 0)),          # resident bias
        ],
        out_specs=pl.BlockSpec((None, th, Wo, Cout), lambda n, t: (n, t, 0, 0)),
        compiler_params=pltpu.CompilerParams(
            dimension_semantics=("parallel", "parallel"),
            vmem_limit_bytes=_vmem_limit_bytes(),
        ),
        cost_estimate=pl.CostEstimate(
            flops=2 * N * Ho * Wo * 9 * C * Cout,
            transcendentals=N * Ho * Wo * Cout,
            bytes_accessed=(xpar.size * 2 + w_taps.size * 2 + Cout * 4
                            + N * Ho * Wo * Cout * 2),
        ),
    )(xpar, w_taps, b_row)


# ---------------------------------------------------------------------------
# FPN_P6P7 forward: whole thing jitted; NHWC bf16 kept between the two convs.
# ---------------------------------------------------------------------------
@jax.jit
def _fpn_p6p7_forward(x_nchw, w6, b6, w7, b7):
    x = jnp.transpose(x_nchw, (0, 2, 3, 1))          # NCHW -> NHWC once
    f3 = _conv3x3_s2_gelu_nhwc(x, w6, b6)            # bf16, stays NHWC
    f4 = _conv3x3_s2_gelu_nhwc(f3, w7, b7)           # consumes bf16 feat3 directly
    return {"feat3": jnp.transpose(f3, (0, 3, 1, 2)).astype(jnp.float32),
            "feat4": jnp.transpose(f4, (0, 3, 1, 2)).astype(jnp.float32)}


class FPN_P6P7:
    def __init__(self, channels, key):
        k = jax.random.split(key, 4)
        fan_in = channels * 3 * 3
        bound = 1.0 / math.sqrt(fan_in)      # PyTorch-style uniform init bound
        shp_w = (channels, channels, 3, 3)
        self.w6 = jax.random.uniform(k[0], shp_w, jnp.float32, -bound, bound)
        self.b6 = jax.random.uniform(k[1], (channels,), jnp.float32, -bound, bound)
        self.w7 = jax.random.uniform(k[2], shp_w, jnp.float32, -bound, bound)
        self.b7 = jax.random.uniform(k[3], (channels,), jnp.float32, -bound, bound)

    def __call__(self, x):
        return _fpn_p6p7_forward(x, self.w6, self.b6, self.w7, self.b7)


# ---------------------------------------------------------------------------
# Pure-JAX reference (correctness check only)
# ---------------------------------------------------------------------------
def _ref_conv_gelu(x, w, b):
    y = lax.conv_general_dilated(
        x, w, window_strides=(2, 2), padding=((1, 1), (1, 1)),
        dimension_numbers=("NCHW", "OIHW", "NCHW"))
    y = y + b[None, :, None, None]
    return 0.5 * y * (1.0 + lax.erf(y / math.sqrt(2.0)))


if __name__ == "__main__":
    key = jax.random.PRNGKey(0)
    kx, kparams = jax.random.split(key)
    N, C, H, W = 2, 4, 16, 16
    x = jax.random.normal(kx, (N, C, H, W), dtype=jnp.float32)

    model = FPN_P6P7(C, kparams)
    out = model(x)
    jax.block_until_ready(out)

    assert out["feat3"].shape == (N, C, 8, 8), out["feat3"].shape
    assert out["feat4"].shape == (N, C, 4, 4), out["feat4"].shape

    # Correctness vs. f32 XLA conv reference (kernel uses bf16 operands with f32
    # MXU accumulation and bf16 intermediate storage -> loosened tolerance).
    ref3 = _ref_conv_gelu(x, model.w6, model.b6)
    ref4 = _ref_conv_gelu(ref3, model.w7, model.b7)
    assert jnp.allclose(out["feat3"], ref3, atol=2e-2, rtol=2e-2)
    assert jnp.allclose(out["feat4"], ref4, atol=2e-2, rtol=2e-2)

    print("KERNEL_OK")
</pallas_src>

<mosaic_0001>
module attributes {stable_mosaic.version = 11 : i64} {
  func.func @_conv3x3s2_gelu_kernel(%arg0: i32, %arg1: i32, %arg2: memref<1x4x9x9x4xbf16, #tpu.memory_space<vmem>>, %arg3: memref<9x4x4xbf16, #tpu.memory_space<vmem>>, %arg4: memref<1x4xf32, #tpu.memory_space<vmem>>, %arg5: memref<1x8x8x4xbf16, #tpu.memory_space<vmem>>) attributes {dimension_semantics = [#tpu.dimension_semantics<parallel>, #tpu.dimension_semantics<parallel>], iteration_bounds = array<i64: 2, 1>, scalar_prefetch = 0 : i64, scratch_operands = 0 : i64, tpu.core_type = #tpu.core_type<tc>, window_params = [{transform_indices = @transform_0, window_bounds = array<i64: 1, 4, 9, 9, 4>}, {pipeline_mode = #tpu.pipeline_mode<synchronous>, transform_indices = @transform_1, window_bounds = array<i64: 9, 4, 4>}, {pipeline_mode = #tpu.pipeline_mode<synchronous>, transform_indices = @transform_2, window_bounds = array<i64: 1, 4>}, {transform_indices = @transform_3, window_bounds = array<i64: 1, 8, 8, 4>}]} {
    %c8_i32 = arith.constant 8 : i32
    %0 = arith.muli %arg1, %c8_i32 : i32
    %cst = arith.constant 0.000000e+00 : f32
    %1 = vector.broadcast %cst : f32 to vector<64x4xf32>
    %c0_i32 = arith.constant 0 : i32
    %2 = arith.addi %0, %c0_i32 : i32
    %c0 = arith.constant 0 : index
    %c0_0 = arith.constant 0 : index
    %3 = arith.index_cast %2 : i32 to index
    %c0_1 = arith.constant 0 : index
    %c0_2 = arith.constant 0 : index
    %4 = vector.load %arg2[%c0, %c0_0, %3, %c0_1, %c0_2] : memref<1x4x9x9x4xbf16, #tpu.memory_space<vmem>>, vector<1x1x8x8x4xbf16>
    %5 = vector.shape_cast %4 : vector<1x1x8x8x4xbf16> to vector<8x8x4xbf16>
    %6 = vector.shape_cast %5 : vector<8x8x4xbf16> to vector<64x4xbf16>
    %c0_3 = arith.constant 0 : index
    %c0_4 = arith.constant 0 : index
    %c0_5 = arith.constant 0 : index
    %7 = vector.load %arg3[%c0_3, %c0_4, %c0_5] : memref<9x4x4xbf16, #tpu.memory_space<vmem>>, vector<1x4x4xbf16>
    %8 = vector.shape_cast %7 : vector<1x4x4xbf16> to vector<4x4xbf16>
    %cst_6 = arith.constant dense<0.000000e+00> : vector<64x4xf32>
    %9 = tpu.matmul %6, %8, %cst_6 {dimension_numbers = #tpu.dot_dimension_numbers<[1], [0], [0], [1], [0, 0, 1, 1], [], []>} : vector<64x4xbf16>, vector<4x4xbf16>, vector<64x4xf32> -> vector<64x4xf32>
    %10 = arith.addf %1, %9 : vector<64x4xf32>
    %c0_i32_7 = arith.constant 0 : i32
    %11 = arith.addi %0, %c0_i32_7 : i32
    %c0_8 = arith.constant 0 : index
    %c1 = arith.constant 1 : index
    %12 = arith.index_cast %11 : i32 to index
    %c0_9 = arith.constant 0 : index
    %c0_10 = arith.constant 0 : index
    %13 = vector.load %arg2[%c0_8, %c1, %12, %c0_9, %c0_10] : memref<1x4x9x9x4xbf16, #tpu.memory_space<vmem>>, vector<1x1x8x8x4xbf16>
    %14 = vector.shape_cast %13 : vector<1x1x8x8x4xbf16> to vector<8x8x4xbf16>
    %15 = vector.shape_cast %14 : vector<8x8x4xbf16> to vector<64x4xbf16>
    %c1_11 = arith.constant 1 : index
    %c0_12 = arith.constant 0 : index
    %c0_13 = arith.constant 0 : index
    %16 = vector.load %arg3[%c1_11, %c0_12, %c0_13] : memref<9x4x4xbf16, #tpu.memory_space<vmem>>, vector<1x4x4xbf16>
    %17 = vector.shape_cast %16 : vector<1x4x4xbf16> to vector<4x4xbf16>
    %cst_14 = arith.constant dense<0.000000e+00> : vector<64x4xf32>
    %18 = tpu.matmul %15, %17, %cst_14 {dimension_numbers = #tpu.dot_dimension_numbers<[1], [0], [0], [1], [0, 0, 1, 1], [], []>} : vector<64x4xbf16>, vector<4x4xbf16>, vector<64x4xf32> -> vector<64x4xf32>
    %19 = arith.addf %10, %18 : vector<64x4xf32>
    %c0_i32_15 = arith.constant 0 : i32
    %20 = arith.addi %0, %c0_i32_15 : i32
    %c0_16 = arith.constant 0 : index
    %c0_17 = arith.constant 0 : index
    %21 = arith.index_cast %20 : i32 to index
    %c1_18 = arith.constant 1 : index
    %c0_19 = arith.constant 0 : index
    %22 = vector.load %arg2[%c0_16, %c0_17, %21, %c1_18, %c0_19] : memref<1x4x9x9x4xbf16, #tpu.memory_space<vmem>>, vector<1x1x8x8x4xbf16>
    %23 = vector.shape_cast %22 : vector<1x1x8x8x4xbf16> to vector<8x8x4xbf16>
    %24 = vector.shape_cast %23 : vector<8x8x4xbf16> to vector<64x4xbf16>
    %c2 = arith.constant 2 : index
    %c0_20 = arith.constant 0 : index
    %c0_21 = arith.constant 0 : index
    %25 = vector.load %arg3[%c2, %c0_20, %c0_21] : memref<9x4x4xbf16, #tpu.memory_space<vmem>>, vector<1x4x4xbf16>
    %26 = vector.shape_cast %25 : vector<1x4x4xbf16> to vector<4x4xbf16>
    %cst_22 = arith.constant dense<0.000000e+00> : vector<64x4xf32>
    %27 = tpu.matmul %24, %26, %cst_22 {dimension_numbers = #tpu.dot_dimension_numbers<[1], [0], [0], [1], [0, 0, 1, 1], [], []>} : vector<64x4xbf16>, vector<4x4xbf16>, vector<64x4xf32> -> vector<64x4xf32>
    %28 = arith.addf %19, %27 : vector<64x4xf32>
    %c0_i32_23 = arith.constant 0 : i32
    %29 = arith.addi %0, %c0_i32_23 : i32
    %c0_24 = arith.constant 0 : index
    %c2_25 = arith.constant 2 : index
    %30 = arith.index_cast %29 : i32 to index
    %c0_26 = arith.constant 0 : index
    %c0_27 = arith.constant 0 : index
    %31 = vector.load %arg2[%c0_24, %c2_25, %30, %c0_26, %c0_27] : memref<1x4x9x9x4xbf16, #tpu.memory_space<vmem>>, vector<1x1x8x8x4xbf16>
    %32 = vector.shape_cast %31 : vector<1x1x8x8x4xbf16> to vector<8x8x4xbf16>
    %33 = vector.shape_cast %32 : vector<8x8x4xbf16> to vector<64x4xbf16>
    %c3 = arith.constant 3 : index
    %c0_28 = arith.constant 0 : index
    %c0_29 = arith.constant 0 : index
    %34 = vector.load %arg3[%c3, %c0_28, %c0_29] : memref<9x4x4xbf16, #tpu.memory_space<vmem>>, vector<1x4x4xbf16>
    %35 = vector.shape_cast %34 : vector<1x4x4xbf16> to vector<4x4xbf16>
    %cst_30 = arith.constant dense<0.000000e+00> : vector<64x4xf32>
    %36 = tpu.matmul %33, %35, %cst_30 {dimension_numbers = #tpu.dot_dimension_numbers<[1], [0], [0], [1], [0, 0, 1, 1], [], []>} : vector<64x4xbf16>, vector<4x4xbf16>, vector<64x4xf32> -> vector<64x4xf32>
    %37 = arith.addf %28, %36 : vector<64x4xf32>
    %c0_i32_31 = arith.constant 0 : i32
    %38 = arith.addi %0, %c0_i32_31 : i32
    %c0_32 = arith.constant 0 : index
    %c3_33 = arith.constant 3 : index
    %39 = arith.index_cast %38 : i32 to index
    %c0_34 = arith.constant 0 : index
    %c0_35 = arith.constant 0 : index
    %40 = vector.load %arg2[%c0_32, %c3_33, %39, %c0_34, %c0_35] : memref<1x4x9x9x4xbf16, #tpu.memory_space<vmem>>, vector<1x1x8x8x4xbf16>
    %41 = vector.shape_cast %40 : vector<1x1x8x8x4xbf16> to vector<8x8x4xbf16>
    %42 = vector.shape_cast %41 : vector<8x8x4xbf16> to vector<64x4xbf16>
    %c4 = arith.constant 4 : index
    %c0_36 = arith.constant 0 : index
    %c0_37 = arith.constant 0 : index
    %43 = vector.load %arg3[%c4, %c0_36, %c0_37] : memref<9x4x4xbf16, #tpu.memory_space<vmem>>, vector<1x4x4xbf16>
    %44 = vector.shape_cast %43 : vector<1x4x4xbf16> to vector<4x4xbf16>
    %cst_38 = arith.constant dense<0.000000e+00> : vector<64x4xf32>
    %45 = tpu.matmul %42, %44, %cst_38 {dimension_numbers = #tpu.dot_dimension_numbers<[1], [0], [0], [1], [0, 0, 1, 1], [], []>} : vector<64x4xbf16>, vector<4x4xbf16>, vector<64x4xf32> -> vector<64x4xf32>
    %46 = arith.addf %37, %45 : vector<64x4xf32>
    %c0_i32_39 = arith.constant 0 : i32
    %47 = arith.addi %0, %c0_i32_39 : i32
    %c0_40 = arith.constant 0 : index
    %c2_41 = arith.constant 2 : index
    %48 = arith.index_cast %47 : i32 to index
    %c1_42 = arith.constant 1 : index
    %c0_43 = arith.constant 0 : index
    %49 = vector.load %arg2[%c0_40, %c2_41, %48, %c1_42, %c0_43] : memref<1x4x9x9x4xbf16, #tpu.memory_space<vmem>>, vector<1x1x8x8x4xbf16>
    %50 = vector.shape_cast %49 : vector<1x1x8x8x4xbf16> to vector<8x8x4xbf16>
    %51 = vector.shape_cast %50 : vector<8x8x4xbf16> to vector<64x4xbf16>
    %c5 = arith.constant 5 : index
    %c0_44 = arith.constant 0 : index
    %c0_45 = arith.constant 0 : index
    %52 = vector.load %arg3[%c5, %c0_44, %c0_45] : memref<9x4x4xbf16, #tpu.memory_space<vmem>>, vector<1x4x4xbf16>
    %53 = vector.shape_cast %52 : vector<1x4x4xbf16> to vector<4x4xbf16>
    %cst_46 = arith.constant dense<0.000000e+00> : vector<64x4xf32>
    %54 = tpu.matmul %51, %53, %cst_46 {dimension_numbers = #tpu.dot_dimension_numbers<[1], [0], [0], [1], [0, 0, 1, 1], [], []>} : vector<64x4xbf16>, vector<4x4xbf16>, vector<64x4xf32> -> vector<64x4xf32>
    %55 = arith.addf %46, %54 : vector<64x4xf32>
    %c1_i32 = arith.constant 1 : i32
    %56 = arith.addi %0, %c1_i32 : i32
    %c0_47 = arith.constant 0 : index
    %c0_48 = arith.constant 0 : index
    %57 = arith.index_cast %56 : i32 to index
    %c0_49 = arith.constant 0 : index
    %c0_50 = arith.constant 0 : index
    %58 = vector.load %arg2[%c0_47, %c0_48, %57, %c0_49, %c0_50] : memref<1x4x9x9x4xbf16, #tpu.memory_space<vmem>>, vector<1x1x8x8x4xbf16>
    %59 = vector.shape_cast %58 : vector<1x1x8x8x4xbf16> to vector<8x8x4xbf16>
    %60 = vector.shape_cast %59 : vector<8x8x4xbf16> to vector<64x4xbf16>
    %c6 = arith.constant 6 : index
    %c0_51 = arith.constant 0 : index
    %c0_52 = arith.constant 0 : index
    %61 = vector.load %arg3[%c6, %c0_51, %c0_52] : memref<9x4x4xbf16, #tpu.memory_space<vmem>>, vector<1x4x4xbf16>
    %62 = vector.shape_cast %61 : vector<1x4x4xbf16> to vector<4x4xbf16>
    %cst_53 = arith.constant dense<0.000000e+00> : vector<64x4xf32>
    %63 = tpu.matmul %60, %62, %cst_53 {dimension_numbers = #tpu.dot_dimension_numbers<[1], [0], [0], [1], [0, 0, 1, 1], [], []>} : vector<64x4xbf16>, vector<4x4xbf16>, vector<64x4xf32> -> vector<64x4xf32>
    %64 = arith.addf %55, %63 : vector<64x4xf32>
    %c1_i32_54 = arith.constant 1 : i32
    %65 = arith.addi %0, %c1_i32_54 : i32
    %c0_55 = arith.constant 0 : index
    %c1_56 = arith.constant 1 : index
    %66 = arith.index_cast %65 : i32 to index
    %c0_57 = arith.constant 0 : index
    %c0_58 = arith.constant 0 : index
    %67 = vector.load %arg2[%c0_55, %c1_56, %66, %c0_57, %c0_58] : memref<1x4x9x9x4xbf16, #tpu.memory_space<vmem>>, vector<1x1x8x8x4xbf16>
    %68 = vector.shape_cast %67 : vector<1x1x8x8x4xbf16> to vector<8x8x4xbf16>
    %69 = vector.shape_cast %68 : vector<8x8x4xbf16> to vector<64x4xbf16>
    %c7 = arith.constant 7 : index
    %c0_59 = arith.constant 0 : index
    %c0_60 = arith.constant 0 : index
    %70 = vector.load %arg3[%c7, %c0_59, %c0_60] : memref<9x4x4xbf16, #tpu.memory_space<vmem>>, vector<1x4x4xbf16>
    %71 = vector.shape_cast %70 : vector<1x4x4xbf16> to vector<4x4xbf16>
    %cst_61 = arith.constant dense<0.000000e+00> : vector<64x4xf32>
    %72 = tpu.matmul %69, %71, %cst_61 {dimension_numbers = #tpu.dot_dimension_numbers<[1], [0], [0], [1], [0, 0, 1, 1], [], []>} : vector<64x4xbf16>, vector<4x4xbf16>, vector<64x4xf32> -> vector<64x4xf32>
    %73 = arith.addf %64, %72 : vector<64x4xf32>
    %c1_i32_62 = arith.constant 1 : i32
    %74 = arith.addi %0, %c1_i32_62 : i32
    %c0_63 = arith.constant 0 : index
    %c0_64 = arith.constant 0 : index
    %75 = arith.index_cast %74 : i32 to index
    %c1_65 = arith.constant 1 : index
    %c0_66 = arith.constant 0 : index
    %76 = vector.load %arg2[%c0_63, %c0_64, %75, %c1_65, %c0_66] : memref<1x4x9x9x4xbf16, #tpu.memory_space<vmem>>, vector<1x1x8x8x4xbf16>
    %77 = vector.shape_cast %76 : vector<1x1x8x8x4xbf16> to vector<8x8x4xbf16>
    %78 = vector.shape_cast %77 : vector<8x8x4xbf16> to vector<64x4xbf16>
    %c8 = arith.constant 8 : index
    %c0_67 = arith.constant 0 : index
    %c0_68 = arith.constant 0 : index
    %79 = vector.load %arg3[%c8, %c0_67, %c0_68] : memref<9x4x4xbf16, #tpu.memory_space<vmem>>, vector<1x4x4xbf16>
    %80 = vector.shape_cast %79 : vector<1x4x4xbf16> to vector<4x4xbf16>
    %cst_69 = arith.constant dense<0.000000e+00> : vector<64x4xf32>
    %81 = tpu.matmul %78, %80, %cst_69 {dimension_numbers = #tpu.dot_dimension_numbers<[1], [0], [0], [1], [0, 0, 1, 1], [], []>} : vector<64x4xbf16>, vector<4x4xbf16>, vector<64x4xf32> -> vector<64x4xf32>
    %82 = arith.addf %73, %81 : vector<64x4xf32>
    %c0_70 = arith.constant 0 : index
    %c0_71 = arith.constant 0 : index
    %83 = vector.load %arg4[%c0_70, %c0_71] : memref<1x4xf32, #tpu.memory_space<vmem>>, vector<1x4xf32>
    %84 = vector.broadcast %83 : vector<1x4xf32> to vector<64x4xf32>
    %85 = arith.addf %82, %84 : vector<64x4xf32>
    %cst_72 = arith.constant 5.000000e-01 : f32
    %86 = vector.broadcast %cst_72 : f32 to vector<64x4xf32>
    %87 = arith.mulf %86, %85 : vector<64x4xf32>
    %cst_73 = arith.constant 0.707106769 : f32
    %88 = vector.broadcast %cst_73 : f32 to vector<64x4xf32>
    %89 = arith.mulf %85, %88 : vector<64x4xf32>
    %90 = math.erf %89 : vector<64x4xf32>
    %cst_74 = arith.constant 1.000000e+00 : f32
    %91 = vector.broadcast %cst_74 : f32 to vector<64x4xf32>
    %92 = arith.addf %91, %90 : vector<64x4xf32>
    %93 = arith.mulf %87, %92 : vector<64x4xf32>
    %94 = vector.shape_cast %93 : vector<64x4xf32> to vector<8x8x4xf32>
    %95 = arith.truncf %94 : vector<8x8x4xf32> to vector<8x8x4xbf16>
    %c0_75 = arith.constant 0 : index
    %c0_76 = arith.constant 0 : index
    %c0_77 = arith.constant 0 : index
    %c0_78 = arith.constant 0 : index
    %96 = vector.load %arg5[%c0_75, %c0_76, %c0_77, %c0_78] : memref<1x8x8x4xbf16, #tpu.memory_space<vmem>>, vector<1x8x8x4xbf16>
    %97 = vector.shape_cast %96 : vector<1x8x8x4xbf16> to vector<8x8x4xbf16>
    %98 = vector.shape_cast %95 : vector<8x8x4xbf16> to vector<1x8x8x4xbf16>
    tpu.vector_store %arg5[%c0_75, %c0_76, %c0_77, %c0_78], %98 {strides = array<i32>} : memref<1x8x8x4xbf16, #tpu.memory_space<vmem>>, vector<1x8x8x4xbf16>,
    return
  }
  func.func @transform_0(%arg0: i32, %arg1: i32) -> (i32, i32, i32, i32, i32) {
    %c0_i32 = arith.constant 0 : i32
    %c0_i32_0 = arith.constant 0 : i32
    %c0_i32_1 = arith.constant 0 : i32
    %c0_i32_2 = arith.constant 0 : i32
    %c0_i32_3 = arith.constant 0 : i32
    return %arg0, %c0_i32, %c0_i32_0, %c0_i32_1, %c0_i32_2 : i32, i32, i32, i32, i32
  }
  func.func @transform_1(%arg0: i32, %arg1: i32) -> (i32, i32, i32) {
    %c0_i32 = arith.constant 0 : i32
    %c0_i32_0 = arith.constant 0 : i32
    %c0_i32_1 = arith.constant 0 : i32
    %c0_i32_2 = arith.constant 0 : i32
    return %c0_i32, %c0_i32_0, %c0_i32_1 : i32, i32, i32
  }
  func.func @transform_2(%arg0: i32, %arg1: i32) -> (i32, i32) {
    %c0_i32 = arith.constant 0 : i32
    %c0_i32_0 = arith.constant 0 : i32
    %c0_i32_1 = arith.constant 0 : i32
    return %c0_i32, %c0_i32_0 : i32, i32
  }
  func.func @transform_3(%arg0: i32, %arg1: i32) -> (i32, i32, i32, i32) {
    %c0_i32 = arith.constant 0 : i32
    %c0_i32_0 = arith.constant 0 : i32
    %c0_i32_1 = arith.constant 0 : i32
    return %arg0, %arg1, %c0_i32, %c0_i32_0 : i32, i32, i32, i32
  }
}

module attributes {stable_mosaic.version = 11 : i64} {
  func.func @_conv3x3s2_gelu_kernel(%arg0: i32, %arg1: i32, %arg2: memref<1x4x5x5x4xbf16, #tpu.memory_space<vmem>>, %arg3: memref<9x4x4xbf16, #tpu.memory_space<vmem>>, %arg4: memref<1x4xf32, #tpu.memory_space<vmem>>, %arg5: memref<1x4x4x4xbf16, #tpu.memory_space<vmem>>) attributes {dimension_semantics = [#tpu.dimension_semantics<parallel>, #tpu.dimension_semantics<parallel>], iteration_bounds = array<i64: 2, 1>, scalar_prefetch = 0 : i64, scratch_operands = 0 : i64, tpu.core_type = #tpu.core_type<tc>, window_params = [{transform_indices = @transform_0, window_bounds = array<i64: 1, 4, 5, 5, 4>}, {pipeline_mode = #tpu.pipeline_mode<synchronous>, transform_indices = @transform_1, window_bounds = array<i64: 9, 4, 4>}, {pipeline_mode = #tpu.pipeline_mode<synchronous>, transform_indices = @transform_2, window_bounds = array<i64: 1, 4>}, {transform_indices = @transform_3, window_bounds = array<i64: 1, 4, 4, 4>}]} {
    %c4_i32 = arith.constant 4 : i32
    %0 = arith.muli %arg1, %c4_i32 : i32
    %cst = arith.constant 0.000000e+00 : f32
    %1 = vector.broadcast %cst : f32 to vector<16x4xf32>
    %c0_i32 = arith.constant 0 : i32
    %2 = arith.addi %0, %c0_i32 : i32
    %c0 = arith.constant 0 : index
    %c0_0 = arith.constant 0 : index
    %3 = arith.index_cast %2 : i32 to index
    %c0_1 = arith.constant 0 : index
    %c0_2 = arith.constant 0 : index
    %4 = vector.load %arg2[%c0, %c0_0, %3, %c0_1, %c0_2] : memref<1x4x5x5x4xbf16, #tpu.memory_space<vmem>>, vector<1x1x4x4x4xbf16>
    %5 = vector.shape_cast %4 : vector<1x1x4x4x4xbf16> to vector<4x4x4xbf16>
    %6 = vector.shape_cast %5 : vector<4x4x4xbf16> to vector<16x4xbf16>
    %c0_3 = arith.constant 0 : index
    %c0_4 = arith.constant 0 : index
    %c0_5 = arith.constant 0 : index
    %7 = vector.load %arg3[%c0_3, %c0_4, %c0_5] : memref<9x4x4xbf16, #tpu.memory_space<vmem>>, vector<1x4x4xbf16>
    %8 = vector.shape_cast %7 : vector<1x4x4xbf16> to vector<4x4xbf16>
    %cst_6 = arith.constant dense<0.000000e+00> : vector<16x4xf32>
    %9 = tpu.matmul %6, %8, %cst_6 {dimension_numbers = #tpu.dot_dimension_numbers<[1], [0], [0], [1], [0, 0, 1, 1], [], []>} : vector<16x4xbf16>, vector<4x4xbf16>, vector<16x4xf32> -> vector<16x4xf32>
    %10 = arith.addf %1, %9 : vector<16x4xf32>
    %c0_i32_7 = arith.constant 0 : i32
    %11 = arith.addi %0, %c0_i32_7 : i32
    %c0_8 = arith.constant 0 : index
    %c1 = arith.constant 1 : index
    %12 = arith.index_cast %11 : i32 to index
    %c0_9 = arith.constant 0 : index
    %c0_10 = arith.constant 0 : index
    %13 = vector.load %arg2[%c0_8, %c1, %12, %c0_9, %c0_10] : memref<1x4x5x5x4xbf16, #tpu.memory_space<vmem>>, vector<1x1x4x4x4xbf16>
    %14 = vector.shape_cast %13 : vector<1x1x4x4x4xbf16> to vector<4x4x4xbf16>
    %15 = vector.shape_cast %14 : vector<4x4x4xbf16> to vector<16x4xbf16>
    %c1_11 = arith.constant 1 : index
    %c0_12 = arith.constant 0 : index
    %c0_13 = arith.constant 0 : index
    %16 = vector.load %arg3[%c1_11, %c0_12, %c0_13] : memref<9x4x4xbf16, #tpu.memory_space<vmem>>, vector<1x4x4xbf16>
    %17 = vector.shape_cast %16 : vector<1x4x4xbf16> to vector<4x4xbf16>
    %cst_14 = arith.constant dense<0.000000e+00> : vector<16x4xf32>
    %18 = tpu.matmul %15, %17, %cst_14 {dimension_numbers = #tpu.dot_dimension_numbers<[1], [0], [0], [1], [0, 0, 1, 1], [], []>} : vector<16x4xbf16>, vector<4x4xbf16>, vector<16x4xf32> -> vector<16x4xf32>
    %19 = arith.addf %10, %18 : vector<16x4xf32>
    %c0_i32_15 = arith.constant 0 : i32
    %20 = arith.addi %0, %c0_i32_15 : i32
    %c0_16 = arith.constant 0 : index
    %c0_17 = arith.constant 0 : index
    %21 = arith.index_cast %20 : i32 to index
    %c1_18 = arith.constant 1 : index
    %c0_19 = arith.constant 0 : index
    %22 = vector.load %arg2[%c0_16, %c0_17, %21, %c1_18, %c0_19] : memref<1x4x5x5x4xbf16, #tpu.memory_space<vmem>>, vector<1x1x4x4x4xbf16>
    %23 = vector.shape_cast %22 : vector<1x1x4x4x4xbf16> to vector<4x4x4xbf16>
    %24 = vector.shape_cast %23 : vector<4x4x4xbf16> to vector<16x4xbf16>
    %c2 = arith.constant 2 : index
    %c0_20 = arith.constant 0 : index
    %c0_21 = arith.constant 0 : index
    %25 = vector.load %arg3[%c2, %c0_20, %c0_21] : memref<9x4x4xbf16, #tpu.memory_space<vmem>>, vector<1x4x4xbf16>
    %26 = vector.shape_cast %25 : vector<1x4x4xbf16> to vector<4x4xbf16>
    %cst_22 = arith.constant dense<0.000000e+00> : vector<16x4xf32>
    %27 = tpu.matmul %24, %26, %cst_22 {dimension_numbers = #tpu.dot_dimension_numbers<[1], [0], [0], [1], [0, 0, 1, 1], [], []>} : vector<16x4xbf16>, vector<4x4xbf16>, vector<16x4xf32> -> vector<16x4xf32>
    %28 = arith.addf %19, %27 : vector<16x4xf32>
    %c0_i32_23 = arith.constant 0 : i32
    %29 = arith.addi %0, %c0_i32_23 : i32
    %c0_24 = arith.constant 0 : index
    %c2_25 = arith.constant 2 : index
    %30 = arith.index_cast %29 : i32 to index
    %c0_26 = arith.constant 0 : index
    %c0_27 = arith.constant 0 : index
    %31 = vector.load %arg2[%c0_24, %c2_25, %30, %c0_26, %c0_27] : memref<1x4x5x5x4xbf16, #tpu.memory_space<vmem>>, vector<1x1x4x4x4xbf16>
    %32 = vector.shape_cast %31 : vector<1x1x4x4x4xbf16> to vector<4x4x4xbf16>
    %33 = vector.shape_cast %32 : vector<4x4x4xbf16> to vector<16x4xbf16>
    %c3 = arith.constant 3 : index
    %c0_28 = arith.constant 0 : index
    %c0_29 = arith.constant 0 : index
    %34 = vector.load %arg3[%c3, %c0_28, %c0_29] : memref<9x4x4xbf16, #tpu.memory_space<vmem>>, vector<1x4x4xbf16>
    %35 = vector.shape_cast %34 : vector<1x4x4xbf16> to vector<4x4xbf16>
    %cst_30 = arith.constant dense<0.000000e+00> : vector<16x4xf32>
    %36 = tpu.matmul %33, %35, %cst_30 {dimension_numbers = #tpu.dot_dimension_numbers<[1], [0], [0], [1], [0, 0, 1, 1], [], []>} : vector<16x4xbf16>, vector<4x4xbf16>, vector<16x4xf32> -> vector<16x4xf32>
    %37 = arith.addf %28, %36 : vector<16x4xf32>
    %c0_i32_31 = arith.constant 0 : i32
    %38 = arith.addi %0, %c0_i32_31 : i32
    %c0_32 = arith.constant 0 : index
    %c3_33 = arith.constant 3 : index
    %39 = arith.index_cast %38 : i32 to index
    %c0_34 = arith.constant 0 : index
    %c0_35 = arith.constant 0 : index
    %40 = vector.load %arg2[%c0_32, %c3_33, %39, %c0_34, %c0_35] : memref<1x4x5x5x4xbf16, #tpu.memory_space<vmem>>, vector<1x1x4x4x4xbf16>
    %41 = vector.shape_cast %40 : vector<1x1x4x4x4xbf16> to vector<4x4x4xbf16>
    %42 = vector.shape_cast %41 : vector<4x4x4xbf16> to vector<16x4xbf16>
    %c4 = arith.constant 4 : index
    %c0_36 = arith.constant 0 : index
    %c0_37 = arith.constant 0 : index
    %43 = vector.load %arg3[%c4, %c0_36, %c0_37] : memref<9x4x4xbf16, #tpu.memory_space<vmem>>, vector<1x4x4xbf16>
    %44 = vector.shape_cast %43 : vector<1x4x4xbf16> to vector<4x4xbf16>
    %cst_38 = arith.constant dense<0.000000e+00> : vector<16x4xf32>
    %45 = tpu.matmul %42, %44, %cst_38 {dimension_numbers = #tpu.dot_dimension_numbers<[1], [0], [0], [1], [0, 0, 1, 1], [], []>} : vector<16x4xbf16>, vector<4x4xbf16>, vector<16x4xf32> -> vector<16x4xf32>
    %46 = arith.addf %37, %45 : vector<16x4xf32>
    %c0_i32_39 = arith.constant 0 : i32
    %47 = arith.addi %0, %c0_i32_39 : i32
    %c0_40 = arith.constant 0 : index
    %c2_41 = arith.constant 2 : index
    %48 = arith.index_cast %47 : i32 to index
    %c1_42 = arith.constant 1 : index
    %c0_43 = arith.constant 0 : index
    %49 = vector.load %arg2[%c0_40, %c2_41, %48, %c1_42, %c0_43] : memref<1x4x5x5x4xbf16, #tpu.memory_space<vmem>>, vector<1x1x4x4x4xbf16>
    %50 = vector.shape_cast %49 : vector<1x1x4x4x4xbf16> to vector<4x4x4xbf16>
    %51 = vector.shape_cast %50 : vector<4x4x4xbf16> to vector<16x4xbf16>
    %c5 = arith.constant 5 : index
    %c0_44 = arith.constant 0 : index
    %c0_45 = arith.constant 0 : index
    %52 = vector.load %arg3[%c5, %c0_44, %c0_45] : memref<9x4x4xbf16, #tpu.memory_space<vmem>>, vector<1x4x4xbf16>
    %53 = vector.shape_cast %52 : vector<1x4x4xbf16> to vector<4x4xbf16>
    %cst_46 = arith.constant dense<0.000000e+00> : vector<16x4xf32>
    %54 = tpu.matmul %51, %53, %cst_46 {dimension_numbers = #tpu.dot_dimension_numbers<[1], [0], [0], [1], [0, 0, 1, 1], [], []>} : vector<16x4xbf16>, vector<4x4xbf16>, vector<16x4xf32> -> vector<16x4xf32>
    %55 = arith.addf %46, %54 : vector<16x4xf32>
    %c1_i32 = arith.constant 1 : i32
    %56 = arith.addi %0, %c1_i32 : i32
    %c0_47 = arith.constant 0 : index
    %c0_48 = arith.constant 0 : index
    %57 = arith.index_cast %56 : i32 to index
    %c0_49 = arith.constant 0 : index
    %c0_50 = arith.constant 0 : index
    %58 = vector.load %arg2[%c0_47, %c0_48, %57, %c0_49, %c0_50] : memref<1x4x5x5x4xbf16, #tpu.memory_space<vmem>>, vector<1x1x4x4x4xbf16>
    %59 = vector.shape_cast %58 : vector<1x1x4x4x4xbf16> to vector<4x4x4xbf16>
    %60 = vector.shape_cast %59 : vector<4x4x4xbf16> to vector<16x4xbf16>
    %c6 = arith.constant 6 : index
    %c0_51 = arith.constant 0 : index
    %c0_52 = arith.constant 0 : index
    %61 = vector.load %arg3[%c6, %c0_51, %c0_52] : memref<9x4x4xbf16, #tpu.memory_space<vmem>>, vector<1x4x4xbf16>
    %62 = vector.shape_cast %61 : vector<1x4x4xbf16> to vector<4x4xbf16>
    %cst_53 = arith.constant dense<0.000000e+00> : vector<16x4xf32>
    %63 = tpu.matmul %60, %62, %cst_53 {dimension_numbers = #tpu.dot_dimension_numbers<[1], [0], [0], [1], [0, 0, 1, 1], [], []>} : vector<16x4xbf16>, vector<4x4xbf16>, vector<16x4xf32> -> vector<16x4xf32>
    %64 = arith.addf %55, %63 : vector<16x4xf32>
    %c1_i32_54 = arith.constant 1 : i32
    %65 = arith.addi %0, %c1_i32_54 : i32
    %c0_55 = arith.constant 0 : index
    %c1_56 = arith.constant 1 : index
    %66 = arith.index_cast %65 : i32 to index
    %c0_57 = arith.constant 0 : index
    %c0_58 = arith.constant 0 : index
    %67 = vector.load %arg2[%c0_55, %c1_56, %66, %c0_57, %c0_58] : memref<1x4x5x5x4xbf16, #tpu.memory_space<vmem>>, vector<1x1x4x4x4xbf16>
    %68 = vector.shape_cast %67 : vector<1x1x4x4x4xbf16> to vector<4x4x4xbf16>
    %69 = vector.shape_cast %68 : vector<4x4x4xbf16> to vector<16x4xbf16>
    %c7 = arith.constant 7 : index
    %c0_59 = arith.constant 0 : index
    %c0_60 = arith.constant 0 : index
    %70 = vector.load %arg3[%c7, %c0_59, %c0_60] : memref<9x4x4xbf16, #tpu.memory_space<vmem>>, vector<1x4x4xbf16>
    %71 = vector.shape_cast %70 : vector<1x4x4xbf16> to vector<4x4xbf16>
    %cst_61 = arith.constant dense<0.000000e+00> : vector<16x4xf32>
    %72 = tpu.matmul %69, %71, %cst_61 {dimension_numbers = #tpu.dot_dimension_numbers<[1], [0], [0], [1], [0, 0, 1, 1], [], []>} : vector<16x4xbf16>, vector<4x4xbf16>, vector<16x4xf32> -> vector<16x4xf32>
    %73 = arith.addf %64, %72 : vector<16x4xf32>
    %c1_i32_62 = arith.constant 1 : i32
    %74 = arith.addi %0, %c1_i32_62 : i32
    %c0_63 = arith.constant 0 : index
    %c0_64 = arith.constant 0 : index
    %75 = arith.index_cast %74 : i32 to index
    %c1_65 = arith.constant 1 : index
    %c0_66 = arith.constant 0 : index
    %76 = vector.load %arg2[%c0_63, %c0_64, %75, %c1_65, %c0_66] : memref<1x4x5x5x4xbf16, #tpu.memory_space<vmem>>, vector<1x1x4x4x4xbf16>
    %77 = vector.shape_cast %76 : vector<1x1x4x4x4xbf16> to vector<4x4x4xbf16>
    %78 = vector.shape_cast %77 : vector<4x4x4xbf16> to vector<16x4xbf16>
    %c8 = arith.constant 8 : index
    %c0_67 = arith.constant 0 : index
    %c0_68 = arith.constant 0 : index
    %79 = vector.load %arg3[%c8, %c0_67, %c0_68] : memref<9x4x4xbf16, #tpu.memory_space<vmem>>, vector<1x4x4xbf16>
    %80 = vector.shape_cast %79 : vector<1x4x4xbf16> to vector<4x4xbf16>
    %cst_69 = arith.constant dense<0.000000e+00> : vector<16x4xf32>
    %81 = tpu.matmul %78, %80, %cst_69 {dimension_numbers = #tpu.dot_dimension_numbers<[1], [0], [0], [1], [0, 0, 1, 1], [], []>} : vector<16x4xbf16>, vector<4x4xbf16>, vector<16x4xf32> -> vector<16x4xf32>
    %82 = arith.addf %73, %81 : vector<16x4xf32>
    %c0_70 = arith.constant 0 : index
    %c0_71 = arith.constant 0 : index
    %83 = vector.load %arg4[%c0_70, %c0_71] : memref<1x4xf32, #tpu.memory_space<vmem>>, vector<1x4xf32>
    %84 = vector.broadcast %83 : vector<1x4xf32> to vector<16x4xf32>
    %85 = arith.addf %82, %84 : vector<16x4xf32>
    %cst_72 = arith.constant 5.000000e-01 : f32
    %86 = vector.broadcast %cst_72 : f32 to vector<16x4xf32>
    %87 = arith.mulf %86, %85 : vector<16x4xf32>
    %cst_73 = arith.constant 0.707106769 : f32
    %88 = vector.broadcast %cst_73 : f32 to vector<16x4xf32>
    %89 = arith.mulf %85, %88 : vector<16x4xf32>
    %90 = math.erf %89 : vector<16x4xf32>
    %cst_74 = arith.constant 1.000000e+00 : f32
    %91 = vector.broadcast %cst_74 : f32 to vector<16x4xf32>
    %92 = arith.addf %91, %90 : vector<16x4xf32>
    %93 = arith.mulf %87, %92 : vector<16x4xf32>
    %94 = vector.shape_cast %93 : vector<16x4xf32> to vector<4x4x4xf32>
    %95 = arith.truncf %94 : vector<4x4x4xf32> to vector<4x4x4xbf16>
    %c0_75 = arith.constant 0 : index
    %c0_76 = arith.constant 0 : index
    %c0_77 = arith.constant 0 : index
    %c0_78 = arith.constant 0 : index
    %96 = vector.load %arg5[%c0_75, %c0_76, %c0_77, %c0_78] : memref<1x4x4x4xbf16, #tpu.memory_space<vmem>>, vector<1x4x4x4xbf16>
    %97 = vector.shape_cast %96 : vector<1x4x4x4xbf16> to vector<4x4x4xbf16>
    %98 = vector.shape_cast %95 : vector<4x4x4xbf16> to vector<1x4x4x4xbf16>
    tpu.vector_store %arg5[%c0_75, %c0_76, %c0_77, %c0_78], %98 {strides = array<i32>} : memref<1x4x4x4xbf16, #tpu.memory_space<vmem>>, vector<1x4x4x4xbf16>,
    return
  }
  func.func @transform_0(%arg0: i32, %arg1: i32) -> (i32, i32, i32, i32, i32) {
    %c0_i32 = arith.constant 0 : i32
    %c0_i32_0 = arith.constant 0 : i32
    %c0_i32_1 = arith.constant 0 : i32
    %c0_i32_2 = arith.constant 0 : i32
    %c0_i32_3 = arith.constant 0 : i32
    return %arg0, %c0_i32, %c0_i32_0, %c0_i32_1, %c0_i32_2 : i32, i32, i32, i32, i32
  }
  func.func @transform_1(%arg0: i32, %arg1: i32) -> (i32, i32, i32) {
    %c0_i32 = arith.constant 0 : i32
    %c0_i32_0 = arith.constant 0 : i32
    %c0_i32_1 = arith.constant 0 : i32
    %c0_i32_2 = arith.constant 0 : i32
    return %c0_i32, %c0_i32_0, %c0_i32_1 : i32, i32, i32
  }
  func.func @transform_2(%arg0: i32, %arg1: i32) -> (i32, i32) {
    %c0_i32 = arith.constant 0 : i32
    %c0_i32_0 = arith.constant 0 : i32
    %c0_i32_1 = arith.constant 0 : i32
    return %c0_i32, %c0_i32_0 : i32, i32
  }
  func.func @transform_3(%arg0: i32, %arg1: i32) -> (i32, i32, i32, i32) {
    %c0_i32 = arith.constant 0 : i32
    %c0_i32_0 = arith.constant 0 : i32
    %c0_i32_1 = arith.constant 0 : i32
    return %arg0, %arg1, %c0_i32, %c0_i32_0 : i32, i32, i32, i32
  }
}

</mosaic_0001>

<llo_original>
// kernel: _fpn_p6p7_forward.3
$region0: #{_fpn_p6p7_forward.3}
  #allocation0 [shape = 'u32[]', space=smem, size = 0x4, offset = 0x4, fixed_abs, tag = 'smem constant byte address 0x4 - core index']
  #allocation1 [shape = 'u32[144,128]{1,0:T(1,128)}', space=vmem, size = 0x12000, scoped, tag = 'internal scratch']
  %s0 = inlined_call_operand.vmem [shape: bf16[2,4,5,5,4], index: 0, kind: input, shape index: {}]
  %s1 = inlined_call_operand.vmem [shape: bf16[9,4,4], index: 1, kind: input, shape index: {}]
  %s2 = inlined_call_operand.vmem [shape: f32[1,4], index: 2, kind: input, shape index: {}]
  %s3 = inlined_call_operand.vmem [shape: bf16[2,4,4,4], index: 3, kind: output, shape index: {}]
  %s4 = sld [smem:[#allocation0]]
  $region45: #{_fpn_p6p7_forward.3} parent=0
    _
  %s6 = ssub.s32 1, %s4
  %s7 = scalar_select 0, %s6, %s4
  loop: start=0, step=1, limit=4
  $region2: #{_fpn_p6p7_forward.3} parent=0 // loop_pre_header
    _
  $region3: #{_fpn_p6p7_forward.3} parent=0 // loop_header
    %s9 = sphi 0, %s13
    %p10 = scmp.ge.s32.totalorder %s9, 4
    %s16 = sphi 0, %s28
    %s17 = sphi 0, %s24
    %s18 = sphi 0, %s16
    %s19 = sphi 0, %s17
    %s20 = sphi 0, %s18
    %s21 = sphi 0, %s19
    %s31 = sphi 0, %s33
    %s34 = sphi 0, %s31
    %s35 = sphi 0, %s34
    %s51 = sphi 0, %s35
    %s55 = sphi 0, %s55
    %s57 = sphi 0, %s55
    %s58 = sphi 0, %s57
    %s72 = sphi 0, %s58
    %s76 = sphi 0, %s76
    %s78 = sphi 0, %s76
    %s79 = sphi 0, %s78
    %s93 = sphi 0, %s79
    %s101 = sphi 0, %s103
    %s104 = sphi 0, %s101
    %s105 = sphi 0, %s104
    %s121 = sphi 0, %s105
  $region4: #{_fpn_p6p7_forward.3} parent=0 // loop_header_branch
    %12 = sbr.rel (%p10) target = $region8
  $region5: #{_fpn_p6p7_forward.3} parent=0 // loop_body
    %s14 = ssub.s32 %s9, 1
    %s15 = ssub.s32 %s9, 2
    %s22 = sadd.s32 1, %s17
    %p23 = scmp.ge.s32.totalorder %s22, 1
    %s24 = scalar_select %p23, 0, %s22
    %s25 = sadd.s32 1, %s16
    %s26 = scalar_select %p23, %s25, %s16
    %p27 = scmp.ge.s32.totalorder %s26, 2
    %s28 = scalar_select %p27, 0, %s26
    %s29 = ssub.s32 %s16, %s28
    %p30 = scmp.eq.s32.totalorder %s29, 0
    %s32 = sadd.s32 %s31, 1
    %s33 = scalar_select %p30, %s31, %s32
    %p36 = pneg %p30
    %p37 = scmp.eq.s32.totalorder %s9, 1
    %p38 = por %p36, %p37
    %p39 = scmp.ne.s32.totalorder %s31, %s34
    %p40 = scmp.eq.s32.totalorder %s9, 0
    %p41 = por %p39, %p40
    %p42 = scmp.ne.s32.totalorder %s31, %s34
    %p43 = scmp.eq.s32.totalorder %s14, 1
    %p44 = por %p42, %p43
    %p45 = scmp.ne.s32.totalorder %s34, %s35
    %p46 = scmp.eq.s32.totalorder %s14, 0
    %p47 = por %p45, %p46
    %p48 = scmp.ne.s32.totalorder %s34, %s35
    %p49 = scmp.eq.s32.totalorder %s15, 1
    %p50 = por %p48, %p49
    %p52 = scmp.ne.s32.totalorder %s35, %s51
    %p53 = scmp.eq.s32.totalorder %s15, 0
    %p54 = por %p52, %p53
    %s56 = sadd.s32 %s55, 1
    %p59 = scmp.eq.s32.totalorder %s9, 1
    %p60 = scmp.ne.s32.totalorder %s55, %s57
    %p61 = scmp.eq.s32.totalorder %s9, 0
    %p62 = por %p60, %p61
    %p63 = scmp.ne.s32.totalorder %s55, %s57
    %p64 = scmp.eq.s32.totalorder %s14, 1
    %p65 = por %p63, %p64
    %p66 = scmp.ne.s32.totalorder %s57, %s58
    %p67 = scmp.eq.s32.totalorder %s14, 0
    %p68 = por %p66, %p67
    %p69 = scmp.ne.s32.totalorder %s57, %s58
    %p70 = scmp.eq.s32.totalorder %s15, 1
    %p71 = por %p69, %p70
    %p73 = scmp.ne.s32.totalorder %s58, %s72
    %p74 = scmp.eq.s32.totalorder %s15, 0
    %p75 = por %p73, %p74
    %s77 = sadd.s32 %s76, 1
    %p80 = scmp.eq.s32.totalorder %s9, 1
    %p81 = scmp.ne.s32.totalorder %s76, %s78
    %p82 = scmp.eq.s32.totalorder %s9, 0
    %p83 = por %p81, %p82
    %p84 = scmp.ne.s32.totalorder %s76, %s78
    %p85 = scmp.eq.s32.totalorder %s14, 1
    %p86 = por %p84, %p85
    %p87 = scmp.ne.s32.totalorder %s78, %s79
    %p88 = scmp.eq.s32.totalorder %s14, 0
    %p89 = por %p87, %p88
    %p90 = scmp.ne.s32.totalorder %s78, %s79
    %p91 = scmp.eq.s32.totalorder %s15, 1
    %p92 = por %p90, %p91
    %p94 = scmp.ne.s32.totalorder %s79, %s93
    %p95 = scmp.eq.s32.totalorder %s15, 0
    %p96 = por %p94, %p95
    %s97 = ssub.s32 %s16, %s28
    %s98 = ssub.s32 %s17, %s24
    %s99 = sor.u32 %s97, %s98
    %p100 = scmp.eq.s32.totalorder %s99, 0
    %s102 = sadd.s32 %s101, 1
    %s103 = scalar_select %p100, %s101, %s102
    %p106 = pneg %p100
    %p107 = scmp.eq.s32.totalorder %s9, 1
    %p108 = por %p106, %p107
    %p109 = scmp.ne.s32.totalorder %s101, %s104
    %p110 = scmp.eq.s32.totalorder %s9, 0
    %p111 = por %p109, %p110
    %p112 = scmp.ne.s32.totalorder %s101, %s104
    %p113 = scmp.eq.s32.totalorder %s14, 1
    %p114 = por %p112, %p113
    %p115 = scmp.ne.s32.totalorder %s104, %s105
    %p116 = scmp.eq.s32.totalorder %s14, 0
    %p117 = por %p115, %p116
    %p118 = scmp.ne.s32.totalorder %s104, %s105
    %p119 = scmp.eq.s32.totalorder %s15, 1
    %p120 = por %p118, %p119
    %p122 = scmp.ne.s32.totalorder %s105, %s121
    %p123 = scmp.eq.s32.totalorder %s15, 0
    %p124 = por %p122, %p123
    %p125 = scmp.le.s32.totalorder 1, %s9
    %p126 = scmp.lt.s32.totalorder %s9, 3
    %p127 = pnand %p125, %p126
    %p128 = pneg %p127
    // Predicated region
    $region9: #{_fpn_p6p7_forward.3} parent=5 // pred_check
      _
    $region10: #{_fpn_p6p7_forward.3} parent=5 // pred_check_branch
      %130 = sbr.rel (%p127) target = $region12
    $region11: #{_fpn_p6p7_forward.3} parent=5 // pred_region
      %s131 = ssub.s32 %s9, 1
      // Predicated region
      $region13: #{_fpn_p6p7_forward.3} parent=11 // pred_check
        %p132 = pneg %p68
      $region14: #{_fpn_p6p7_forward.3} parent=11 // pred_check_branch
        %134 = sbr.rel (%p132) target = $region16
      $region15: #{_fpn_p6p7_forward.3} parent=11 // pred_region
        _
      $region16: #{_fpn_p6p7_forward.3} parent=11 // pred_fallthru
        _
      // Predicated region
      $region17: #{_fpn_p6p7_forward.3} parent=11 // pred_check
        %p135 = pneg %p89
      $region18: #{_fpn_p6p7_forward.3} parent=11 // pred_check_branch
        %137 = sbr.rel (%p135) target = $region20
      $region19: #{_fpn_p6p7_forward.3} parent=11 // pred_region
        _
      $region20: #{_fpn_p6p7_forward.3} parent=11 // pred_fallthru
        _
    $region12: #{_fpn_p6p7_forward.3} parent=5 // pred_fallthru
      _
    %p138 = scmp.lt.s32.totalorder %s9, 2
    // Predicated region
    $region21: #{_fpn_p6p7_forward.3} parent=5 // pred_check
      %p139 = pneg %p138
    $region22: #{_fpn_p6p7_forward.3} parent=5 // pred_check_branch
      %141 = sbr.rel (%p139) target = $region24
    $region23: #{_fpn_p6p7_forward.3} parent=5 // pred_region
      // Predicated region
      $region25: #{_fpn_p6p7_forward.3} parent=23 // pred_check
        %p142 = pneg %p41
      $region26: #{_fpn_p6p7_forward.3} parent=23 // pred_check_branch
        %144 = sbr.rel (%p142) target = $region28
      $region27: #{_fpn_p6p7_forward.3} parent=23 // pred_region
        %p145 = scmp.lt.s32.totalorder %s16, 1
        %s146 = scalar_select %p145, %s16, 1
        %s147 = smul.addr %s146, 20
        %s148 = smul.addr %s147, 4
        %s149 = scalar_lea.vmem %s0, %s148
      $region28: #{_fpn_p6p7_forward.3} parent=23 // pred_fallthru
        _
    $region24: #{_fpn_p6p7_forward.3} parent=5 // pred_fallthru
      _
    %p150 = scmp.le.s32.totalorder 1, %s9
    %p151 = scmp.lt.s32.totalorder %s9, 3
    %p152 = pnand %p150, %p151
    %p153 = pneg %p152
    // Predicated region
    $region29: #{_fpn_p6p7_forward.3} parent=5 // pred_check
      _
    $region30: #{_fpn_p6p7_forward.3} parent=5 // pred_check_branch
      %155 = sbr.rel (%p152) target = $region32
    $region31: #{_fpn_p6p7_forward.3} parent=5 // pred_region
      %s156 = ssub.s32 %s9, 1
      %p157 = scmp.lt.s32.totalorder %s18, 1
      %s158 = scalar_select %p157, %s18, 1
      %s159 = smul.addr %s158, 20
      %s160 = smul.addr %s159, 4
      %s161 = scalar_lea.vmem %s0, %s160
      %p162 = pneg %p47
      %p163 = pneg %p44
      %p164 = pneg %p68
      %p165 = pneg %p65
      %p166 = pneg %p89
      %p167 = pneg %p86
      %p168 = pneg %p117
      %p169 = pneg %p114
      %s170 = smul.u32 4, %s19
      %p171 = scmp.lt.s32.totalorder %s18, 1
      %s172 = scalar_select %p171, %s18, 1
      %p173 = scmp.lt.s32.totalorder %s170, 3
      %s174 = scalar_select %p173, %s170, 3
      %s175 = smul.addr %s172, 4
      %s176 = sadd.s32 %s174, %s175
      %s177 = smul.addr %s176, 2
      %s178 = scalar_lea.vmem %s3, %s177
      %p179 = scmp.lt.s32.totalorder %s18, 1
      %s180 = scalar_select %p179, %s18, 1
      %s181 = smul.addr %s180, 20
      %s182 = smul.addr %s181, 4
      %s183 = scalar_lea.vmem %s0, %s182
      %s184 = smul.u32 4, %s19
      %p185 = scmp.lt.s32.totalorder %s18, 1
      %s186 = scalar_select %p185, %s18, 1
      %p187 = scmp.lt.s32.totalorder %s184, 3
      %s188 = scalar_select %p187, %s184, 3
      %s189 = smul.addr %s186, 4
      %s190 = sadd.s32 %s188, %s189
      %s191 = smul.addr %s190, 2
      %s192 = scalar_lea.vmem %s3, %s191
      %s193 = smul.u32 4, %s19
      %s195 = smul.u32 %s19, 4
      %s196 = smul.addr %s195, 4
      %s197 = scalar_lea.vmem %s183, %s196
      %v198 = vld [vmem:[%s197] sm:$0x3]
      %v199 = vld [vmem:[%s197 + $0x4] sm:$0x3]
      %v200 = vld [vmem:[%s197 + $0x8] sm:$0x3]
      %v201 = vld [vmem:[%s197 + $0xc] sm:$0x3]
      %v202 = vld [vmem:[%s1] sm:$0x3]
      %s203 = sadd.s32 %s195, 5
      %s204 = smul.addr %s203, 4
      %s205 = scalar_lea.vmem %s183, %s204
      %v206 = vld [vmem:[%s205] sm:$0x3]
      %v207 = vld [vmem:[%s205 + $0x4] sm:$0x3]
      %v208 = vld [vmem:[%s205 + $0x8] sm:$0x3]
      %v209 = vld [vmem:[%s205 + $0xc] sm:$0x3]
      %s210 = scalar_lea.vmem %s1, 2
      %v211 = vld [vmem:[%s210] sm:$0x3]
      %v216 = vcombine.low %v206, %v207
      %v217 = vcombine.low %v208, %v209
      %v219 = vunpack.c.l.s4 1983009808
      %v220 = vunpack.c.0.s8 %v219
      %v221 = vlaneseq
      %v222 = vshrl.u32 %v221, 7
      %v223 = vsub.s32 %v220, %v222
      %v224 = vrot.slane %v216, %v223
      %v226 = vunpack.c.l.s4 1983009808
      %v227 = vunpack.c.0.s8 %v226
      %v228 = vlaneseq
      %v229 = vshrl.u32 %v228, 7
      %v230 = vsub.s32 %v227, %v229
      %v231 = vrot.slane %v217, %v230
      %v232 = vcombine.low %v224, %v231
      %vm233 = vcmask 31744
      %v235 = vsel %vm233, %v232, 0
      %vm237 = vcmask 1041408
      %v239 = vsel %vm237, %v211, 0
      %241 = vmatprep.subr.bf16.mxu0 0
      %242 = vmatpush1.bf16.msra.mxu0 %v239
      %243 = vmatprep.subr.bf16.mxu0 0
      %244 = vmatpush1.bf16.msra.mxu0 0
      %245 = vmatprep.subr.bf16.mxu0 0
      %246 = vmatpush1.bf16.msra.mxu0 0
      %247 = vmatprep.subr.bf16.mxu0 0
      %248 = vmatpush1.bf16.msra.mxu0 0
      %249 = vmatprep.subr.bf16.mxu0 0
      %250 = vmatpush1.bf16.msra.mxu0 0
      %251 = vmatprep.subr.bf16.mxu0 0
      %252 = vmatpush1.bf16.msra.mxu0 0
      %253 = vmatprep.subr.bf16.mxu0 0
      %254 = vmatpush1.bf16.msra.mxu0 0
      %255 = vmatprep.subr.bf16.mxu0 0
      %256 = vmatpush1.bf16.msra.mxu0 0
      %257 = vmatprep.subr.bf16.mxu0 0
      %258 = vmatpush1.bf16.msra.mxu0 0
      %259 = vmatprep.subr.bf16.mxu0 0
      %260 = vmatpush1.bf16.msra.mxu0 0
      %261 = vmatprep.subr.bf16.mxu0 0
      %262 = vmatpush1.bf16.msra.mxu0 0
      %263 = vmatprep.subr.bf16.mxu0 0
      %264 = vmatpush1.bf16.msra.mxu0 0
      %265 = vmatprep.subr.bf16.mxu0 0
      %266 = vmatpush1.bf16.msra.mxu0 0
      %267 = vmatprep.subr.bf16.mxu0 0
      %268 = vmatpush1.bf16.msra.mxu0 0
      %269 = vmatprep.subr.bf16.mxu0 0
      %270 = vmatpush1.bf16.msra.mxu0 0
      %271 = vmatprep.subr.bf16.mxu0 0
      %272 = vmatpush1.bf16.msra.mxu0 0
      %273 = vmatprep.mubr.bf16.mxu0 0
      %274 = vmatmul.mubr.bf16.gmra.mrb[0].mxu0 %v235
      %v275 = vpop.f32.mrb[0].mxu0
      %v276 = vadd.f32 0.0, %v275
      %v277 = vpop.f32.mrb[0].mxu0
      %v278 = vpop.f32.mrb[0].mxu0
      %v279 = vadd.f32 0.0, %v278
      %v280 = vpop.f32.mrb[0].mxu0
      %281 = vdwg.mxu0
      %v286 = vcombine.low %v198, %v199
      %v287 = vcombine.low %v200, %v201
      %v289 = vunpack.c.l.s4 1983009808
      %v290 = vunpack.c.0.s8 %v289
      %v291 = vlaneseq
      %v292 = vshrl.u32 %v291, 7
      %v293 = vsub.s32 %v290, %v292
      %v294 = vrot.slane %v286, %v293
      %v296 = vunpack.c.l.s4 1983009808
      %v297 = vunpack.c.0.s8 %v296
      %v298 = vlaneseq
      %v299 = vshrl.u32 %v298, 7
      %v300 = vsub.s32 %v297, %v299
      %v301 = vrot.slane %v287, %v300
      %v302 = vcombine.low %v294, %v301
      %v304 = vsel %vm233, %v302, 0
      %v307 = vsel %vm237, %v202, 0
      %309 = vmatprep.subr.bf16.mxu0 0
      %310 = vmatpush1.bf16.msra.mxu0 %v307
      %311 = vmatprep.subr.bf16.mxu0 0
      %312 = vmatpush1.bf16.msra.mxu0 0
      %313 = vmatprep.subr.bf16.mxu0 0
      %314 = vmatpush1.bf16.msra.mxu0 0
      %315 = vmatprep.subr.bf16.mxu0 0
      %316 = vmatpush1.bf16.msra.mxu0 0
      %317 = vmatprep.subr.bf16.mxu0 0
      %318 = vmatpush1.bf16.msra.mxu0 0
      %319 = vmatprep.subr.bf16.mxu0 0
      %320 = vmatpush1.bf16.msra.mxu0 0
      %321 = vmatprep.subr.bf16.mxu0 0
      %322 = vmatpush1.bf16.msra.mxu0 0
      %323 = vmatprep.subr.bf16.mxu0 0
      %324 = vmatpush1.bf16.msra.mxu0 0
      %325 = vmatprep.subr.bf16.mxu0 0
      %326 = vmatpush1.bf16.msra.mxu0 0
      %327 = vmatprep.subr.bf16.mxu0 0
      %328 = vmatpush1.bf16.msra.mxu0 0
      %329 = vmatprep.subr.bf16.mxu0 0
      %330 = vmatpush1.bf16.msra.mxu0 0
      %331 = vmatprep.subr.bf16.mxu0 0
      %332 = vmatpush1.bf16.msra.mxu0 0
      %333 = vmatprep.subr.bf16.mxu0 0
      %334 = vmatpush1.bf16.msra.mxu0 0
      %335 = vmatprep.subr.bf16.mxu0 0
      %336 = vmatpush1.bf16.msra.mxu0 0
      %337 = vmatprep.subr.bf16.mxu0 0
      %338 = vmatpush1.bf16.msra.mxu0 0
      %339 = vmatprep.subr.bf16.mxu0 0
      %340 = vmatpush1.bf16.msra.mxu0 0
      %341 = vmatprep.mubr.bf16.mxu0 0
      %342 = vmatmul.mubr.bf16.gmra.mrb[0].mxu0 %v304
      %v343 = vpop.f32.mrb[0].mxu0
      %v344 = vadd.f32 %v276, %v343
      %v345 = vpop.f32.mrb[0].mxu0
      %v346 = vpop.f32.mrb[0].mxu0
      %v347 = vadd.f32 %v279, %v346
      %v348 = vpop.f32.mrb[0].mxu0
      %349 = vdwg.mxu0
      %v350 = vld [vmem:[%s197] sm:$0x7]
      %v351 = vld [vmem:[%s197 + $0x4] sm:$0x7]
      %v352 = vld [vmem:[%s197 + $0x8] sm:$0x7]
      %v353 = vld [vmem:[%s197 + $0xc] sm:$0x7]
      %v359 = vunpack.c.l.s4 1983009808
      %v360 = vunpack.c.0.s8 %v359
      %v361 = vlaneseq
      %v362 = vshrl.u32 %v361, 7
      %v363 = vsub.s32 %v360, %v362
      %v364 = vrot.slane %v350, %v363
      %v365 = vcombine.high %v364, %v364
      %v367 = vunpack.c.l.s4 1983009808
      %v368 = vunpack.c.0.s8 %v367
      %v369 = vlaneseq
      %v370 = vshrl.u32 %v369, 7
      %v371 = vsub.s32 %v368, %v370
      %v372 = vrot.slane %v351, %v371
      %v373 = vcombine.high %v372, %v372
      %v375 = vunpack.c.l.s4 1983009808
      %v376 = vunpack.c.0.s8 %v375
      %v377 = vlaneseq
      %v378 = vshrl.u32 %v377, 7
      %v379 = vsub.s32 %v376, %v378
      %v380 = vrot.slane %v352, %v379
      %v381 = vcombine.high %v380, %v380
      %v383 = vunpack.c.l.s4 1983009808
      %v384 = vunpack.c.0.s8 %v383
      %v385 = vlaneseq
      %v386 = vshrl.u32 %v385, 7
      %v387 = vsub.s32 %v384, %v386
      %v388 = vrot.slane %v353, %v387
      %v389 = vcombine.high %v388, %v388
      %vm390 = vsmask.f32 1280
      %vm391 = vsmask.f32 3336
      %vm392 = vmor %vm390, %vm391
      %vm393 = vsmask.f32 5392
      %vm394 = vmor %vm392, %vm393
      %vm395 = vsmask.f32 7448
      %vm396 = vmor %vm394, %vm395
      %v398 = vshrl.u32 %v364, 16
      %v400 = vrot.slane %v398, 6
      %v401 = vshll.u32 %v364, 16
      %v403 = vrot.slane %v401, 7
      %v404 = vor.u32 %v400, %v403
      %v405 = vrot.slane %v404, 2
      %v407 = vshll.u32 %v365, 16
      %v409 = vrot.slane %v407, 7
      %v410 = vsel %vm396, %v405, %v409
      %v412 = vshrl.u32 %v372, 16
      %v414 = vrot.slane %v412, 6
      %v415 = vshll.u32 %v372, 16
      %v417 = vrot.slane %v415, 7
      %v418 = vor.u32 %v414, %v417
      %v419 = vrot.slane %v418, 2
      %v421 = vshll.u32 %v373, 16
      %v423 = vrot.slane %v421, 7
      %v424 = vsel %vm396, %v419, %v423
      %v426 = vshrl.u32 %v380, 16
      %v428 = vrot.slane %v426, 6
      %v429 = vshll.u32 %v380, 16
      %v431 = vrot.slane %v429, 7
      %v432 = vor.u32 %v428, %v431
      %v433 = vrot.slane %v432, 2
      %v435 = vshll.u32 %v381, 16
      %v437 = vrot.slane %v435, 7
      %v438 = vsel %vm396, %v433, %v437
      %v440 = vshrl.u32 %v388, 16
      %v442 = vrot.slane %v440, 6
      %v443 = vshll.u32 %v388, 16
      %v445 = vrot.slane %v443, 7
      %v446 = vor.u32 %v442, %v445
      %v447 = vrot.slane %v446, 2
      %v449 = vshll.u32 %v389, 16
      %v451 = vrot.slane %v449, 7
      %v452 = vsel %vm396, %v447, %v451
      %s453 = scalar_lea.vmem %s1, 4
      %v454 = vld [vmem:[%s453] sm:$0x3]
      %v455 = vcombine.low %v410, %v424
      %v456 = vcombine.low %v438, %v452
      %v458 = vunpack.c.l.s4 1983009808
      %v459 = vunpack.c.0.s8 %v458
      %v460 = vlaneseq
      %v461 = vshrl.u32 %v460, 7
      %v462 = vsub.s32 %v459, %v461
      %v463 = vrot.slane %v455, %v462
      %v465 = vunpack.c.l.s4 1983009808
      %v466 = vunpack.c.0.s8 %v465
      %v467 = vlaneseq
      %v468 = vshrl.u32 %v467, 7
      %v469 = vsub.s32 %v466, %v468
      %v470 = vrot.slane %v456, %v469
      %v471 = vcombine.low %v463, %v470
      %v473 = vsel %vm233, %v471, 0
      %v476 = vsel %vm237, %v454, 0
      %478 = vmatprep.subr.bf16.mxu0 0
      %479 = vmatpush1.bf16.msra.mxu0 %v476
      %480 = vmatprep.subr.bf16.mxu0 0
      %481 = vmatpush1.bf16.msra.mxu0 0
      %482 = vmatprep.subr.bf16.mxu0 0
      %483 = vmatpush1.bf16.msra.mxu0 0
      %484 = vmatprep.subr.bf16.mxu0 0
      %485 = vmatpush1.bf16.msra.mxu0 0
      %486 = vmatprep.subr.bf16.mxu0 0
      %487 = vmatpush1.bf16.msra.mxu0 0
      %488 = vmatprep.subr.bf16.mxu0 0
      %489 = vmatpush1.bf16.msra.mxu0 0
      %490 = vmatprep.subr.bf16.mxu0 0
      %491 = vmatpush1.bf16.msra.mxu0 0
      %492 = vmatprep.subr.bf16.mxu0 0
      %493 = vmatpush1.bf16.msra.mxu0 0
      %494 = vmatprep.subr.bf16.mxu0 0
      %495 = vmatpush1.bf16.msra.mxu0 0
      %496 = vmatprep.subr.bf16.mxu0 0
      %497 = vmatpush1.bf16.msra.mxu0 0
      %498 = vmatprep.subr.bf16.mxu0 0
      %499 = vmatpush1.bf16.msra.mxu0 0
      %500 = vmatprep.subr.bf16.mxu0 0
      %501 = vmatpush1.bf16.msra.mxu0 0
      %502 = vmatprep.subr.bf16.mxu0 0
      %503 = vmatpush1.bf16.msra.mxu0 0
      %504 = vmatprep.subr.bf16.mxu0 0
      %505 = vmatpush1.bf16.msra.mxu0 0
      %506 = vmatprep.subr.bf16.mxu0 0
      %507 = vmatpush1.bf16.msra.mxu0 0
      %508 = vmatprep.subr.bf16.mxu0 0
      %509 = vmatpush1.bf16.msra.mxu0 0
      %510 = vmatprep.mubr.bf16.mxu0 0
      %511 = vmatmul.mubr.bf16.gmra.mrb[0].mxu0 %v473
      %v512 = vpop.f32.mrb[0].mxu0
      %v513 = vadd.f32 0.0, %v512
      %v514 = vpop.f32.mrb[0].mxu0
      %v515 = vpop.f32.mrb[0].mxu0
      %v516 = vadd.f32 0.0, %v515
      %v517 = vpop.f32.mrb[0].mxu0
      %518 = vdwg.mxu0
      %v519 = vadd.f32 %v344, %v513
      %v520 = vadd.f32 %v347, %v516
      %s521 = sadd.s32 %s195, 10
      %s522 = smul.addr %s521, 4
      %s523 = scalar_lea.vmem %s183, %s522
      %v524 = vld [vmem:[%s523] sm:$0x3]
      %v525 = vld [vmem:[%s523 + $0x4] sm:$0x3]
      %v526 = vld [vmem:[%s523 + $0x8] sm:$0x3]
      %v527 = vld [vmem:[%s523 + $0xc] sm:$0x3]
      %s528 = scalar_lea.vmem %s1, 6
      %v529 = vld [vmem:[%s528] sm:$0x3]
      %v534 = vcombine.low %v524, %v525
      %v535 = vcombine.low %v526, %v527
      %v537 = vunpack.c.l.s4 1983009808
      %v538 = vunpack.c.0.s8 %v537
      %v539 = vlaneseq
      %v540 = vshrl.u32 %v539, 7
      %v541 = vsub.s32 %v538, %v540
      %v542 = vrot.slane %v534, %v541
      %v544 = vunpack.c.l.s4 1983009808
      %v545 = vunpack.c.0.s8 %v544
      %v546 = vlaneseq
      %v547 = vshrl.u32 %v546, 7
      %v548 = vsub.s32 %v545, %v547
      %v549 = vrot.slane %v535, %v548
      %v550 = vcombine.low %v542, %v549
      %v552 = vsel %vm233, %v550, 0
      %v555 = vsel %vm237, %v529, 0
      %557 = vmatprep.subr.bf16.mxu0 0
      %558 = vmatpush1.bf16.msra.mxu0 %v555
      %559 = vmatprep.subr.bf16.mxu0 0
      %560 = vmatpush1.bf16.msra.mxu0 0
      %561 = vmatprep.subr.bf16.mxu0 0
      %562 = vmatpush1.bf16.msra.mxu0 0
      %563 = vmatprep.subr.bf16.mxu0 0
      %564 = vmatpush1.bf16.msra.mxu0 0
      %565 = vmatprep.subr.bf16.mxu0 0
      %566 = vmatpush1.bf16.msra.mxu0 0
      %567 = vmatprep.subr.bf16.mxu0 0
      %568 = vmatpush1.bf16.msra.mxu0 0
      %569 = vmatprep.subr.bf16.mxu0 0
      %570 = vmatpush1.bf16.msra.mxu0 0
      %571 = vmatprep.subr.bf16.mxu0 0
      %572 = vmatpush1.bf16.msra.mxu0 0
      %573 = vmatprep.subr.bf16.mxu0 0
      %574 = vmatpush1.bf16.msra.mxu0 0
      %575 = vmatprep.subr.bf16.mxu0 0
      %576 = vmatpush1.bf16.msra.mxu0 0
      %577 = vmatprep.subr.bf16.mxu0 0
      %578 = vmatpush1.bf16.msra.mxu0 0
      %579 = vmatprep.subr.bf16.mxu0 0
      %580 = vmatpush1.bf16.msra.mxu0 0
      %581 = vmatprep.subr.bf16.mxu0 0
      %582 = vmatpush1.bf16.msra.mxu0 0
      %583 = vmatprep.subr.bf16.mxu0 0
      %584 = vmatpush1.bf16.msra.mxu0 0
      %585 = vmatprep.subr.bf16.mxu0 0
      %586 = vmatpush1.bf16.msra.mxu0 0
      %587 = vmatprep.subr.bf16.mxu0 0
      %588 = vmatpush1.bf16.msra.mxu0 0
      %589 = vmatprep.mubr.bf16.mxu0 0
      %590 = vmatmul.mubr.bf16.gmra.mrb[0].mxu0 %v552
      %v591 = vpop.f32.mrb[0].mxu0
      %v592 = vadd.f32 0.0, %v591
      %v593 = vpop.f32.mrb[0].mxu0
      %v594 = vpop.f32.mrb[0].mxu0
      %v595 = vadd.f32 0.0, %v594
      %v596 = vpop.f32.mrb[0].mxu0
      %597 = vdwg.mxu0
      %v598 = vadd.f32 %v519, %v592
      %v599 = vadd.f32 %v520, %v595
      %s600 = sadd.s32 %s195, 15
      %s601 = smul.addr %s600, 4
      %s602 = scalar_lea.vmem %s183, %s601
      %v603 = vld [vmem:[%s602] sm:$0x3]
      %v604 = vld [vmem:[%s602 + $0x4] sm:$0x3]
      %v605 = vld [vmem:[%s602 + $0x8] sm:$0x3]
      %v606 = vld [vmem:[%s602 + $0xc] sm:$0x3]
      %s607 = scalar_lea.vmem %s1, 8
      %v608 = vld [vmem:[%s607] sm:$0x3]
      %v613 = vcombine.low %v603, %v604
      %v614 = vcombine.low %v605, %v606
      %v616 = vunpack.c.l.s4 1983009808
      %v617 = vunpack.c.0.s8 %v616
      %v618 = vlaneseq
      %v619 = vshrl.u32 %v618, 7
      %v620 = vsub.s32 %v617, %v619
      %v621 = vrot.slane %v613, %v620
      %v623 = vunpack.c.l.s4 1983009808
      %v624 = vunpack.c.0.s8 %v623
      %v625 = vlaneseq
      %v626 = vshrl.u32 %v625, 7
      %v627 = vsub.s32 %v624, %v626
      %v628 = vrot.slane %v614, %v627
      %v629 = vcombine.low %v621, %v628
      %v631 = vsel %vm233, %v629, 0
      %v634 = vsel %vm237, %v608, 0
      %636 = vmatprep.subr.bf16.mxu0 0
      %637 = vmatpush1.bf16.msra.mxu0 %v634
      %638 = vmatprep.subr.bf16.mxu0 0
      %639 = vmatpush1.bf16.msra.mxu0 0
      %640 = vmatprep.subr.bf16.mxu0 0
      %641 = vmatpush1.bf16.msra.mxu0 0
      %642 = vmatprep.subr.bf16.mxu0 0
      %643 = vmatpush1.bf16.msra.mxu0 0
      %644 = vmatprep.subr.bf16.mxu0 0
      %645 = vmatpush1.bf16.msra.mxu0 0
      %646 = vmatprep.subr.bf16.mxu0 0
      %647 = vmatpush1.bf16.msra.mxu0 0
      %648 = vmatprep.subr.bf16.mxu0 0
      %649 = vmatpush1.bf16.msra.mxu0 0
      %650 = vmatprep.subr.bf16.mxu0 0
      %651 = vmatpush1.bf16.msra.mxu0 0
      %652 = vmatprep.subr.bf16.mxu0 0
      %653 = vmatpush1.bf16.msra.mxu0 0
      %654 = vmatprep.subr.bf16.mxu0 0
      %655 = vmatpush1.bf16.msra.mxu0 0
      %656 = vmatprep.subr.bf16.mxu0 0
      %657 = vmatpush1.bf16.msra.mxu0 0
      %658 = vmatprep.subr.bf16.mxu0 0
      %659 = vmatpush1.bf16.msra.mxu0 0
      %660 = vmatprep.subr.bf16.mxu0 0
      %661 = vmatpush1.bf16.msra.mxu0 0
      %662 = vmatprep.subr.bf16.mxu0 0
      %663 = vmatpush1.bf16.msra.mxu0 0
      %664 = vmatprep.subr.bf16.mxu0 0
      %665 = vmatpush1.bf16.msra.mxu0 0
      %666 = vmatprep.subr.bf16.mxu0 0
      %667 = vmatpush1.bf16.msra.mxu0 0
      %668 = vmatprep.mubr.bf16.mxu0 0
      %669 = vmatmul.mubr.bf16.gmra.mrb[0].mxu0 %v631
      %v670 = vpop.f32.mrb[0].mxu0
      %v671 = vadd.f32 0.0, %v670
      %v672 = vpop.f32.mrb[0].mxu0
      %v673 = vpop.f32.mrb[0].mxu0
      %v674 = vadd.f32 0.0, %v673
      %v675 = vpop.f32.mrb[0].mxu0
      %676 = vdwg.mxu0
      %v677 = vadd.f32 %v598, %v671
      %v678 = vadd.f32 %v599, %v674
      %v679 = vld [vmem:[%s523] sm:$0x7]
      %v680 = vld [vmem:[%s523 + $0x4] sm:$0x7]
      %v681 = vld [vmem:[%s523 + $0x8] sm:$0x7]
      %v682 = vld [vmem:[%s523 + $0xc] sm:$0x7]
      %v688 = vunpack.c.l.s4 1983009808
      %v689 = vunpack.c.0.s8 %v688
      %v690 = vlaneseq
      %v691 = vshrl.u32 %v690, 7
      %v692 = vsub.s32 %v689, %v691
      %v693 = vrot.slane %v679, %v692
      %v694 = vcombine.high %v693, %v693
      %v696 = vunpack.c.l.s4 1983009808
      %v697 = vunpack.c.0.s8 %v696
      %v698 = vlaneseq
      %v699 = vshrl.u32 %v698, 7
      %v700 = vsub.s32 %v697, %v699
      %v701 = vrot.slane %v680, %v700
      %v702 = vcombine.high %v701, %v701
      %v704 = vunpack.c.l.s4 1983009808
      %v705 = vunpack.c.0.s8 %v704
      %v706 = vlaneseq
      %v707 = vshrl.u32 %v706, 7
      %v708 = vsub.s32 %v705, %v707
      %v709 = vrot.slane %v681, %v708
      %v710 = vcombine.high %v709, %v709
      %v712 = vunpack.c.l.s4 1983009808
      %v713 = vunpack.c.0.s8 %v712
      %v714 = vlaneseq
      %v715 = vshrl.u32 %v714, 7
      %v716 = vsub.s32 %v713, %v715
      %v717 = vrot.slane %v682, %v716
      %v718 = vcombine.high %v717, %v717
      %v720 = vshrl.u32 %v693, 16
      %v722 = vrot.slane %v720, 6
      %v723 = vshll.u32 %v693, 16
      %v725 = vrot.slane %v723, 7
      %v726 = vor.u32 %v722, %v725
      %v727 = vrot.slane %v726, 2
      %v729 = vshll.u32 %v694, 16
      %v731 = vrot.slane %v729, 7
      %v732 = vsel %vm396, %v727, %v731
      %v734 = vshrl.u32 %v701, 16
      %v736 = vrot.slane %v734, 6
      %v737 = vshll.u32 %v701, 16
      %v739 = vrot.slane %v737, 7
      %v740 = vor.u32 %v736, %v739
      %v741 = vrot.slane %v740, 2
      %v743 = vshll.u32 %v702, 16
      %v745 = vrot.slane %v743, 7
      %v746 = vsel %vm396, %v741, %v745
      %v748 = vshrl.u32 %v709, 16
      %v750 = vrot.slane %v748, 6
      %v751 = vshll.u32 %v709, 16
      %v753 = vrot.slane %v751, 7
      %v754 = vor.u32 %v750, %v753
      %v755 = vrot.slane %v754, 2
      %v757 = vshll.u32 %v710, 16
      %v759 = vrot.slane %v757, 7
      %v760 = vsel %vm396, %v755, %v759
      %v762 = vshrl.u32 %v717, 16
      %v764 = vrot.slane %v762, 6
      %v765 = vshll.u32 %v717, 16
      %v767 = vrot.slane %v765, 7
      %v768 = vor.u32 %v764, %v767
      %v769 = vrot.slane %v768, 2
      %v771 = vshll.u32 %v718, 16
      %v773 = vrot.slane %v771, 7
      %v774 = vsel %vm396, %v769, %v773
      %s775 = scalar_lea.vmem %s1, 10
      %v776 = vld [vmem:[%s775] sm:$0x3]
      %v777 = vcombine.low %v732, %v746
      %v778 = vcombine.low %v760, %v774
      %v780 = vunpack.c.l.s4 1983009808
      %v781 = vunpack.c.0.s8 %v780
      %v782 = vlaneseq
      %v783 = vshrl.u32 %v782, 7
      %v784 = vsub.s32 %v781, %v783
      %v785 = vrot.slane %v777, %v784
      %v787 = vunpack.c.l.s4 1983009808
      %v788 = vunpack.c.0.s8 %v787
      %v789 = vlaneseq
      %v790 = vshrl.u32 %v789, 7
      %v791 = vsub.s32 %v788, %v790
      %v792 = vrot.slane %v778, %v791
      %v793 = vcombine.low %v785, %v792
      %v795 = vsel %vm233, %v793, 0
      %v798 = vsel %vm237, %v776, 0
      %800 = vmatprep.subr.bf16.mxu0 0
      %801 = vmatpush1.bf16.msra.mxu0 %v798
      %802 = vmatprep.subr.bf16.mxu0 0
      %803 = vmatpush1.bf16.msra.mxu0 0
      %804 = vmatprep.subr.bf16.mxu0 0
      %805 = vmatpush1.bf16.msra.mxu0 0
      %806 = vmatprep.subr.bf16.mxu0 0
      %807 = vmatpush1.bf16.msra.mxu0 0
      %808 = vmatprep.subr.bf16.mxu0 0
      %809 = vmatpush1.bf16.msra.mxu0 0
      %810 = vmatprep.subr.bf16.mxu0 0
      %811 = vmatpush1.bf16.msra.mxu0 0
      %812 = vmatprep.subr.bf16.mxu0 0
      %813 = vmatpush1.bf16.msra.mxu0 0
      %814 = vmatprep.subr.bf16.mxu0 0
      %815 = vmatpush1.bf16.msra.mxu0 0
      %816 = vmatprep.subr.bf16.mxu0 0
      %817 = vmatpush1.bf16.msra.mxu0 0
      %818 = vmatprep.subr.bf16.mxu0 0
      %819 = vmatpush1.bf16.msra.mxu0 0
      %820 = vmatprep.subr.bf16.mxu0 0
      %821 = vmatpush1.bf16.msra.mxu0 0
      %822 = vmatprep.subr.bf16.mxu0 0
      %823 = vmatpush1.bf16.msra.mxu0 0
      %824 = vmatprep.subr.bf16.mxu0 0
      %825 = vmatpush1.bf16.msra.mxu0 0
      %826 = vmatprep.subr.bf16.mxu0 0
      %827 = vmatpush1.bf16.msra.mxu0 0
      %828 = vmatprep.subr.bf16.mxu0 0
      %829 = vmatpush1.bf16.msra.mxu0 0
      %830 = vmatprep.subr.bf16.mxu0 0
      %831 = vmatpush1.bf16.msra.mxu0 0
      %832 = vmatprep.mubr.bf16.mxu0 0
      %833 = vmatmul.mubr.bf16.gmra.mrb[0].mxu0 %v795
      %v834 = vpop.f32.mrb[0].mxu0
      %v835 = vadd.f32 0.0, %v834
      %v836 = vpop.f32.mrb[0].mxu0
      %v837 = vpop.f32.mrb[0].mxu0
      %v838 = vadd.f32 0.0, %v837
      %v839 = vpop.f32.mrb[0].mxu0
      %840 = vdwg.mxu0
      %v841 = vadd.f32 %v677, %v835
      %v842 = vadd.f32 %v678, %v838
      %s843 = sadd.s32 %s195, 1
      %s844 = smul.addr %s843, 4
      %s845 = scalar_lea.vmem %s183, %s844
      %v846 = vld [vmem:[%s845] sm:$0x3]
      %v847 = vld [vmem:[%s845 + $0x4] sm:$0x3]
      %v848 = vld [vmem:[%s845 + $0x8] sm:$0x3]
      %v849 = vld [vmem:[%s845 + $0xc] sm:$0x3]
      %s850 = scalar_lea.vmem %s1, 12
      %v851 = vld [vmem:[%s850] sm:$0x3]
      %v856 = vcombine.low %v846, %v847
      %v857 = vcombine.low %v848, %v849
      %v859 = vunpack.c.l.s4 1983009808
      %v860 = vunpack.c.0.s8 %v859
      %v861 = vlaneseq
      %v862 = vshrl.u32 %v861, 7
      %v863 = vsub.s32 %v860, %v862
      %v864 = vrot.slane %v856, %v863
      %v866 = vunpack.c.l.s4 1983009808
      %v867 = vunpack.c.0.s8 %v866
      %v868 = vlaneseq
      %v869 = vshrl.u32 %v868, 7
      %v870 = vsub.s32 %v867, %v869
      %v871 = vrot.slane %v857, %v870
      %v872 = vcombine.low %v864, %v871
      %v874 = vsel %vm233, %v872, 0
      %v877 = vsel %vm237, %v851, 0
      %879 = vmatprep.subr.bf16.mxu0 0
      %880 = vmatpush1.bf16.msra.mxu0 %v877
      %881 = vmatprep.subr.bf16.mxu0 0
      %882 = vmatpush1.bf16.msra.mxu0 0
      %883 = vmatprep.subr.bf16.mxu0 0
      %884 = vmatpush1.bf16.msra.mxu0 0
      %885 = vmatprep.subr.bf16.mxu0 0
      %886 = vmatpush1.bf16.msra.mxu0 0
      %887 = vmatprep.subr.bf16.mxu0 0
      %888 = vmatpush1.bf16.msra.mxu0 0
      %889 = vmatprep.subr.bf16.mxu0 0
      %890 = vmatpush1.bf16.msra.mxu0 0
      %891 = vmatprep.subr.bf16.mxu0 0
      %892 = vmatpush1.bf16.msra.mxu0 0
      %893 = vmatprep.subr.bf16.mxu0 0
      %894 = vmatpush1.bf16.msra.mxu0 0
      %895 = vmatprep.subr.bf16.mxu0 0
      %896 = vmatpush1.bf16.msra.mxu0 0
      %897 = vmatprep.subr.bf16.mxu0 0
      %898 = vmatpush1.bf16.msra.mxu0 0
      %899 = vmatprep.subr.bf16.mxu0 0
      %900 = vmatpush1.bf16.msra.mxu0 0
      %901 = vmatprep.subr.bf16.mxu0 0
      %902 = vmatpush1.bf16.msra.mxu0 0
      %903 = vmatprep.subr.bf16.mxu0 0
      %904 = vmatpush1.bf16.msra.mxu0 0
      %905 = vmatprep.subr.bf16.mxu0 0
      %906 = vmatpush1.bf16.msra.mxu0 0
      %907 = vmatprep.subr.bf16.mxu0 0
      %908 = vmatpush1.bf16.msra.mxu0 0
      %909 = vmatprep.subr.bf16.mxu0 0
      %910 = vmatpush1.bf16.msra.mxu0 0
      %911 = vmatprep.mubr.bf16.mxu0 0
      %912 = vmatmul.mubr.bf16.gmra.mrb[0].mxu0 %v874
      %v913 = vpop.f32.mrb[0].mxu0
      %v914 = vadd.f32 0.0, %v913
      %v915 = vpop.f32.mrb[0].mxu0
      %v916 = vpop.f32.mrb[0].mxu0
      %v917 = vadd.f32 0.0, %v916
      %v918 = vpop.f32.mrb[0].mxu0
      %919 = vdwg.mxu0
      %v920 = vadd.f32 %v841, %v914
      %v921 = vadd.f32 %v842, %v917
      %s922 = sadd.s32 %s843, 5
      %s923 = smul.addr %s922, 4
      %s924 = scalar_lea.vmem %s183, %s923
      %v925 = vld [vmem:[%s924] sm:$0x3]
      %v926 = vld [vmem:[%s924 + $0x4] sm:$0x3]
      %v927 = vld [vmem:[%s924 + $0x8] sm:$0x3]
      %v928 = vld [vmem:[%s924 + $0xc] sm:$0x3]
      %s929 = scalar_lea.vmem %s1, 14
      %v930 = vld [vmem:[%s929] sm:$0x3]
      %v935 = vcombine.low %v925, %v926
      %v936 = vcombine.low %v927, %v928
      %v938 = vunpack.c.l.s4 1983009808
      %v939 = vunpack.c.0.s8 %v938
      %v940 = vlaneseq
      %v941 = vshrl.u32 %v940, 7
      %v942 = vsub.s32 %v939, %v941
      %v943 = vrot.slane %v935, %v942
      %v945 = vunpack.c.l.s4 1983009808
      %v946 = vunpack.c.0.s8 %v945
      %v947 = vlaneseq
      %v948 = vshrl.u32 %v947, 7
      %v949 = vsub.s32 %v946, %v948
      %v950 = vrot.slane %v936, %v949
      %v951 = vcombine.low %v943, %v950
      %v953 = vsel %vm233, %v951, 0
      %v956 = vsel %vm237, %v930, 0
      %958 = vmatprep.subr.bf16.mxu0 0
      %959 = vmatpush1.bf16.msra.mxu0 %v956
      %960 = vmatprep.subr.bf16.mxu0 0
      %961 = vmatpush1.bf16.msra.mxu0 0
      %962 = vmatprep.subr.bf16.mxu0 0
      %963 = vmatpush1.bf16.msra.mxu0 0
      %964 = vmatprep.subr.bf16.mxu0 0
      %965 = vmatpush1.bf16.msra.mxu0 0
      %966 = vmatprep.subr.bf16.mxu0 0
      %967 = vmatpush1.bf16.msra.mxu0 0
      %968 = vmatprep.subr.bf16.mxu0 0
      %969 = vmatpush1.bf16.msra.mxu0 0
      %970 = vmatprep.subr.bf16.mxu0 0
      %971 = vmatpush1.bf16.msra.mxu0 0
      %972 = vmatprep.subr.bf16.mxu0 0
      %973 = vmatpush1.bf16.msra.mxu0 0
      %974 = vmatprep.subr.bf16.mxu0 0
      %975 = vmatpush1.bf16.msra.mxu0 0
      %976 = vmatprep.subr.bf16.mxu0 0
      %977 = vmatpush1.bf16.msra.mxu0 0
      %978 = vmatprep.subr.bf16.mxu0 0
      %979 = vmatpush1.bf16.msra.mxu0 0
      %980 = vmatprep.subr.bf16.mxu0 0
      %981 = vmatpush1.bf16.msra.mxu0 0
      %982 = vmatprep.subr.bf16.mxu0 0
      %983 = vmatpush1.bf16.msra.mxu0 0
      %984 = vmatprep.subr.bf16.mxu0 0
      %985 = vmatpush1.bf16.msra.mxu0 0
      %986 = vmatprep.subr.bf16.mxu0 0
      %987 = vmatpush1.bf16.msra.mxu0 0
      %988 = vmatprep.subr.bf16.mxu0 0
      %989 = vmatpush1.bf16.msra.mxu0 0
      %990 = vmatprep.mubr.bf16.mxu0 0
      %991 = vmatmul.mubr.bf16.gmra.mrb[0].mxu0 %v953
      %v992 = vpop.f32.mrb[0].mxu0
      %v993 = vadd.f32 0.0, %v992
      %v994 = vpop.f32.mrb[0].mxu0
      %v995 = vpop.f32.mrb[0].mxu0
      %v996 = vadd.f32 0.0, %v995
      %v997 = vpop.f32.mrb[0].mxu0
      %998 = vdwg.mxu0
      %v999 = vadd.f32 %v920, %v993
      %v1000 = vadd.f32 %v921, %v996
      %v1001 = vld [vmem:[%s845] sm:$0x7]
      %v1002 = vld [vmem:[%s845 + $0x4] sm:$0x7]
      %v1003 = vld [vmem:[%s845 + $0x8] sm:$0x7]
      %v1004 = vld [vmem:[%s845 + $0xc] sm:$0x7]
      %v1010 = vunpack.c.l.s4 1983009808
      %v1011 = vunpack.c.0.s8 %v1010
      %v1012 = vlaneseq
      %v1013 = vshrl.u32 %v1012, 7
      %v1014 = vsub.s32 %v1011, %v1013
      %v1015 = vrot.slane %v1001, %v1014
      %v1016 = vcombine.high %v1015, %v1015
      %v1018 = vunpack.c.l.s4 1983009808
      %v1019 = vunpack.c.0.s8 %v1018
      %v1020 = vlaneseq
      %v1021 = vshrl.u32 %v1020, 7
      %v1022 = vsub.s32 %v1019, %v1021
      %v1023 = vrot.slane %v1002, %v1022
      %v1024 = vcombine.high %v1023, %v1023
      %v1026 = vunpack.c.l.s4 1983009808
      %v1027 = vunpack.c.0.s8 %v1026
      %v1028 = vlaneseq
      %v1029 = vshrl.u32 %v1028, 7
      %v1030 = vsub.s32 %v1027, %v1029
      %v1031 = vrot.slane %v1003, %v1030
      %v1032 = vcombine.high %v1031, %v1031
      %v1034 = vunpack.c.l.s4 1983009808
      %v1035 = vunpack.c.0.s8 %v1034
      %v1036 = vlaneseq
      %v1037 = vshrl.u32 %v1036, 7
      %v1038 = vsub.s32 %v1035, %v1037
      %v1039 = vrot.slane %v1004, %v1038
      %v1040 = vcombine.high %v1039, %v1039
      %v1042 = vshrl.u32 %v1015, 16
      %v1044 = vrot.slane %v1042, 6
      %v1045 = vshll.u32 %v1015, 16
      %v1047 = vrot.slane %v1045, 7
      %v1048 = vor.u32 %v1044, %v1047
      %v1049 = vrot.slane %v1048, 2
      %v1051 = vshll.u32 %v1016, 16
      %v1053 = vrot.slane %v1051, 7
      %v1054 = vsel %vm396, %v1049, %v1053
      %v1056 = vshrl.u32 %v1023, 16
      %v1058 = vrot.slane %v1056, 6
      %v1059 = vshll.u32 %v1023, 16
      %v1061 = vrot.slane %v1059, 7
      %v1062 = vor.u32 %v1058, %v1061
      %v1063 = vrot.slane %v1062, 2
      %v1065 = vshll.u32 %v1024, 16
      %v1067 = vrot.slane %v1065, 7
      %v1068 = vsel %vm396, %v1063, %v1067
      %v1070 = vshrl.u32 %v1031, 16
      %v1072 = vrot.slane %v1070, 6
      %v1073 = vshll.u32 %v1031, 16
      %v1075 = vrot.slane %v1073, 7
      %v1076 = vor.u32 %v1072, %v1075
      %v1077 = vrot.slane %v1076, 2
      %v1079 = vshll.u32 %v1032, 16
      %v1081 = vrot.slane %v1079, 7
      %v1082 = vsel %vm396, %v1077, %v1081
      %v1084 = vshrl.u32 %v1039, 16
      %v1086 = vrot.slane %v1084, 6
      %v1087 = vshll.u32 %v1039, 16
      %v1089 = vrot.slane %v1087, 7
      %v1090 = vor.u32 %v1086, %v1089
      %v1091 = vrot.slane %v1090, 2
      %v1093 = vshll.u32 %v1040, 16
      %v1095 = vrot.slane %v1093, 7
      %v1096 = vsel %vm396, %v1091, %v1095
      %s1097 = scalar_lea.vmem %s1, 16
      %v1098 = vld [vmem:[%s1097] sm:$0x3]
      %v1099 = vcombine.low %v1054, %v1068
      %v1100 = vcombine.low %v1082, %v1096
      %v1102 = vunpack.c.l.s4 1983009808
      %v1103 = vunpack.c.0.s8 %v1102
      %v1104 = vlaneseq
      %v1105 = vshrl.u32 %v1104, 7
      %v1106 = vsub.s32 %v1103, %v1105
      %v1107 = vrot.slane %v1099, %v1106
      %v1109 = vunpack.c.l.s4 1983009808
      %v1110 = vunpack.c.0.s8 %v1109
      %v1111 = vlaneseq
      %v1112 = vshrl.u32 %v1111, 7
      %v1113 = vsub.s32 %v1110, %v1112
      %v1114 = vrot.slane %v1100, %v1113
      %v1115 = vcombine.low %v1107, %v1114
      %v1117 = vsel %vm233, %v1115, 0
      %v1120 = vsel %vm237, %v1098, 0
      %1122 = vmatprep.subr.bf16.mxu0 0
      %1123 = vmatpush1.bf16.msra.mxu0 %v1120
      %1124 = vmatprep.subr.bf16.mxu0 0
      %1125 = vmatpush1.bf16.msra.mxu0 0
      %1126 = vmatprep.subr.bf16.mxu0 0
      %1127 = vmatpush1.bf16.msra.mxu0 0
      %1128 = vmatprep.subr.bf16.mxu0 0
      %1129 = vmatpush1.bf16.msra.mxu0 0
      %1130 = vmatprep.subr.bf16.mxu0 0
      %1131 = vmatpush1.bf16.msra.mxu0 0
      %1132 = vmatprep.subr.bf16.mxu0 0
      %1133 = vmatpush1.bf16.msra.mxu0 0
      %1134 = vmatprep.subr.bf16.mxu0 0
      %1135 = vmatpush1.bf16.msra.mxu0 0
      %1136 = vmatprep.subr.bf16.mxu0 0
      %1137 = vmatpush1.bf16.msra.mxu0 0
      %1138 = vmatprep.subr.bf16.mxu0 0
      %1139 = vmatpush1.bf16.msra.mxu0 0
      %1140 = vmatprep.subr.bf16.mxu0 0
      %1141 = vmatpush1.bf16.msra.mxu0 0
      %1142 = vmatprep.subr.bf16.mxu0 0
      %1143 = vmatpush1.bf16.msra.mxu0 0
      %1144 = vmatprep.subr.bf16.mxu0 0
      %1145 = vmatpush1.bf16.msra.mxu0 0
      %1146 = vmatprep.subr.bf16.mxu0 0
      %1147 = vmatpush1.bf16.msra.mxu0 0
      %1148 = vmatprep.subr.bf16.mxu0 0
      %1149 = vmatpush1.bf16.msra.mxu0 0
      %1150 = vmatprep.subr.bf16.mxu0 0
      %1151 = vmatpush1.bf16.msra.mxu0 0
      %1152 = vmatprep.subr.bf16.mxu0 0
      %1153 = vmatpush1.bf16.msra.mxu0 0
      %1154 = vmatprep.mubr.bf16.mxu0 0
      %1155 = vmatmul.mubr.bf16.gmra.mrb[0].mxu0 %v1117
      %v1156 = vpop.f32.mrb[0].mxu0
      %v1157 = vadd.f32 0.0, %v1156
      %v1158 = vpop.f32.mrb[0].mxu0
      %v1159 = vpop.f32.mrb[0].mxu0
      %v1160 = vadd.f32 0.0, %v1159
      %v1161 = vpop.f32.mrb[0].mxu0
      %1162 = vdwg.mxu0
      %v1163 = vadd.f32 %v999, %v1157
      %v1164 = vadd.f32 %v1000, %v1160
      %v1165 = vld [vmem:[%s2] sm:$0x1]
      %v1167 = vlaneseq
      %v1168 = vshrl.u32 %v1167, 7
      %v1169 = vsub.s32 0, %v1168
      %v1170 = vrot.slane %v1165, %v1169
      %v1172 = vadd.f32 %v1163, %v1170
      %v1173 = vadd.f32 %v1164, %v1170
      %v1174 = vmul.f32 %v1172, 0.5
      %v1175 = vmul.f32 %v1173, 0.5
      %v1176 = vmul.f32 %v1172, 0.70710677
      %v1177 = vmul.f32 %v1173, 0.70710677
      %v1178 = verf.f32.pop %v1176
      %v1179 = verf.f32.pop %v1177
      %v1180 = vadd.f32 %v1178, 1.0
      %v1181 = vadd.f32 %v1179, 1.0
      %v1182 = vmul.f32 %v1174, %v1180
      %v1183 = vmul.f32 %v1175, %v1181
      %v1186 = vcombine.high %v1182, %v1182
      %v1187 = vcombine.high %v1183, %v1183
      %v1190 = vpack.c.bf16 %v1182, %v1182
      %v1191 = vpack.c.bf16 %v1186, %v1186
      %v1192 = vpack.c.bf16 %v1183, %v1183
      %v1193 = vpack.c.bf16 %v1187, %v1187
      %vm1194 = vcmask 25600
      %1195 = vst.msk [vmem:[%s192] sm:$0x3] %vm1194, %v1190
      %1196 = vst.msk [vmem:[%s192 + $0x2] sm:$0x3] %vm1194, %v1191
      %1197 = vst.msk [vmem:[%s192 + $0x4] sm:$0x3] %vm1194, %v1192
      %1198 = vst.msk [vmem:[%s192 + $0x6] sm:$0x3] %vm1194, %v1193
      %s1199 = smul.u32 4, %s19
      %p1200 = scmp.lt.s32.totalorder %s18, 1
      %s1201 = scalar_select %p1200, %s18, 1
      %p1202 = scmp.lt.s32.totalorder %s1199, 3
      %s1203 = scalar_select %p1202, %s1199, 3
      %s1204 = smul.addr %s1201, 4
      %s1205 = sadd.s32 %s1203, %s1204
      %s1206 = smul.addr %s1205, 2
      %s1207 = scalar_lea.vmem %s3, %s1206
      // Predicated region
      $region33: #{_fpn_p6p7_forward.3} parent=31 // pred_check
        %p1208 = pneg %p114
      $region34: #{_fpn_p6p7_forward.3} parent=31 // pred_check_branch
        %1210 = sbr.rel (%p1208) target = $region36
      $region35: #{_fpn_p6p7_forward.3} parent=31 // pred_region
        %s1211 = smul.u32 4, %s19
      $region36: #{_fpn_p6p7_forward.3} parent=31 // pred_fallthru
        _
    $region32: #{_fpn_p6p7_forward.3} parent=5 // pred_fallthru
      _
    %p1212 = scmp.le.s32.totalorder 2, %s9
    // Predicated region
    $region37: #{_fpn_p6p7_forward.3} parent=5 // pred_check
      %p1213 = pneg %p1212
    $region38: #{_fpn_p6p7_forward.3} parent=5 // pred_check_branch
      %1215 = sbr.rel (%p1213) target = $region40
    $region39: #{_fpn_p6p7_forward.3} parent=5 // pred_region
      %s1216 = ssub.s32 %s9, 2
      // Predicated region
      $region41: #{_fpn_p6p7_forward.3} parent=39 // pred_check
        %p1217 = pneg %p120
      $region42: #{_fpn_p6p7_forward.3} parent=39 // pred_check_branch
        %1219 = sbr.rel (%p1217) target = $region44
      $region43: #{_fpn_p6p7_forward.3} parent=39 // pred_region
        %s1220 = smul.u32 4, %s21
        %p1221 = scmp.lt.s32.totalorder %s20, 1
        %s1222 = scalar_select %p1221, %s20, 1
        %p1223 = scmp.lt.s32.totalorder %s1220, 3
        %s1224 = scalar_select %p1223, %s1220, 3
        %s1225 = smul.addr %s1222, 4
        %s1226 = sadd.s32 %s1224, %s1225
        %s1227 = smul.addr %s1226, 2
        %s1228 = scalar_lea.vmem %s3, %s1227
      $region44: #{_fpn_p6p7_forward.3} parent=39 // pred_fallthru
        _
    $region40: #{_fpn_p6p7_forward.3} parent=5 // pred_fallthru
      _
  $region6: #{_fpn_p6p7_forward.3} parent=0 // loop_footer
    %s13 = sadd.s32 1, %s9
  $region7: #{_fpn_p6p7_forward.3} parent=0 // loop_footer_branch
    %8 = sbr.rel target = $region3
  $region8: #{_fpn_p6p7_forward.3} parent=0 // loop_exit
    _

// kernel: _fpn_p6p7_forward.2
$region0: #{_fpn_p6p7_forward.2}
  #allocation0 [shape = 'u32[]', space=smem, size = 0x4, offset = 0x4, fixed_abs, tag = 'smem constant byte address 0x4 - core index']
  #allocation1 [shape = 'u32[144,128]{1,0:T(1,128)}', space=vmem, size = 0x12000, scoped, tag = 'internal scratch']
  %s0 = inlined_call_operand.vmem [shape: bf16[2,4,9,9,4], index: 0, kind: input, shape index: {}]
  %s1 = inlined_call_operand.vmem [shape: bf16[9,4,4], index: 1, kind: input, shape index: {}]
  %s2 = inlined_call_operand.vmem [shape: f32[1,4], index: 2, kind: input, shape index: {}]
  %s3 = inlined_call_operand.vmem [shape: bf16[2,8,8,4], index: 3, kind: output, shape index: {}]
  %s4 = sld [smem:[#allocation0]]
  $region45: #{_fpn_p6p7_forward.2} parent=0
    _
  %s6 = ssub.s32 1, %s4
  %s7 = scalar_select 0, %s6, %s4
  loop: start=0, step=1, limit=4
  $region2: #{_fpn_p6p7_forward.2} parent=0 // loop_pre_header
    _
  $region3: #{_fpn_p6p7_forward.2} parent=0 // loop_header
    %s9 = sphi 0, %s13
    %p10 = scmp.ge.s32.totalorder %s9, 4
    %s16 = sphi 0, %s28
    %s17 = sphi 0, %s24
    %s18 = sphi 0, %s16
    %s19 = sphi 0, %s17
    %s20 = sphi 0, %s18
    %s21 = sphi 0, %s19
    %s31 = sphi 0, %s33
    %s34 = sphi 0, %s31
    %s35 = sphi 0, %s34
    %s51 = sphi 0, %s35
    %s55 = sphi 0, %s55
    %s57 = sphi 0, %s55
    %s58 = sphi 0, %s57
    %s72 = sphi 0, %s58
    %s76 = sphi 0, %s76
    %s78 = sphi 0, %s76
    %s79 = sphi 0, %s78
    %s93 = sphi 0, %s79
    %s101 = sphi 0, %s103
    %s104 = sphi 0, %s101
    %s105 = sphi 0, %s104
    %s121 = sphi 0, %s105
  $region4: #{_fpn_p6p7_forward.2} parent=0 // loop_header_branch
    %12 = sbr.rel (%p10) target = $region8
  $region5: #{_fpn_p6p7_forward.2} parent=0 // loop_body
    %s14 = ssub.s32 %s9, 1
    %s15 = ssub.s32 %s9, 2
    %s22 = sadd.s32 1, %s17
    %p23 = scmp.ge.s32.totalorder %s22, 1
    %s24 = scalar_select %p23, 0, %s22
    %s25 = sadd.s32 1, %s16
    %s26 = scalar_select %p23, %s25, %s16
    %p27 = scmp.ge.s32.totalorder %s26, 2
    %s28 = scalar_select %p27, 0, %s26
    %s29 = ssub.s32 %s16, %s28
    %p30 = scmp.eq.s32.totalorder %s29, 0
    %s32 = sadd.s32 %s31, 1
    %s33 = scalar_select %p30, %s31, %s32
    %p36 = pneg %p30
    %p37 = scmp.eq.s32.totalorder %s9, 1
    %p38 = por %p36, %p37
    %p39 = scmp.ne.s32.totalorder %s31, %s34
    %p40 = scmp.eq.s32.totalorder %s9, 0
    %p41 = por %p39, %p40
    %p42 = scmp.ne.s32.totalorder %s31, %s34
    %p43 = scmp.eq.s32.totalorder %s14, 1
    %p44 = por %p42, %p43
    %p45 = scmp.ne.s32.totalorder %s34, %s35
    %p46 = scmp.eq.s32.totalorder %s14, 0
    %p47 = por %p45, %p46
    %p48 = scmp.ne.s32.totalorder %s34, %s35
    %p49 = scmp.eq.s32.totalorder %s15, 1
    %p50 = por %p48, %p49
    %p52 = scmp.ne.s32.totalorder %s35, %s51
    %p53 = scmp.eq.s32.totalorder %s15, 0
    %p54 = por %p52, %p53
    %s56 = sadd.s32 %s55, 1
    %p59 = scmp.eq.s32.totalorder %s9, 1
    %p60 = scmp.ne.s32.totalorder %s55, %s57
    %p61 = scmp.eq.s32.totalorder %s9, 0
    %p62 = por %p60, %p61
    %p63 = scmp.ne.s32.totalorder %s55, %s57
    %p64 = scmp.eq.s32.totalorder %s14, 1
    %p65 = por %p63, %p64
    %p66 = scmp.ne.s32.totalorder %s57, %s58
    %p67 = scmp.eq.s32.totalorder %s14, 0
    %p68 = por %p66, %p67
    %p69 = scmp.ne.s32.totalorder %s57, %s58
    %p70 = scmp.eq.s32.totalorder %s15, 1
    %p71 = por %p69, %p70
    %p73 = scmp.ne.s32.totalorder %s58, %s72
    %p74 = scmp.eq.s32.totalorder %s15, 0
    %p75 = por %p73, %p74
    %s77 = sadd.s32 %s76, 1
    %p80 = scmp.eq.s32.totalorder %s9, 1
    %p81 = scmp.ne.s32.totalorder %s76, %s78
    %p82 = scmp.eq.s32.totalorder %s9, 0
    %p83 = por %p81, %p82
    %p84 = scmp.ne.s32.totalorder %s76, %s78
    %p85 = scmp.eq.s32.totalorder %s14, 1
    %p86 = por %p84, %p85
    %p87 = scmp.ne.s32.totalorder %s78, %s79
    %p88 = scmp.eq.s32.totalorder %s14, 0
    %p89 = por %p87, %p88
    %p90 = scmp.ne.s32.totalorder %s78, %s79
    %p91 = scmp.eq.s32.totalorder %s15, 1
    %p92 = por %p90, %p91
    %p94 = scmp.ne.s32.totalorder %s79, %s93
    %p95 = scmp.eq.s32.totalorder %s15, 0
    %p96 = por %p94, %p95
    %s97 = ssub.s32 %s16, %s28
    %s98 = ssub.s32 %s17, %s24
    %s99 = sor.u32 %s97, %s98
    %p100 = scmp.eq.s32.totalorder %s99, 0
    %s102 = sadd.s32 %s101, 1
    %s103 = scalar_select %p100, %s101, %s102
    %p106 = pneg %p100
    %p107 = scmp.eq.s32.totalorder %s9, 1
    %p108 = por %p106, %p107
    %p109 = scmp.ne.s32.totalorder %s101, %s104
    %p110 = scmp.eq.s32.totalorder %s9, 0
    %p111 = por %p109, %p110
    %p112 = scmp.ne.s32.totalorder %s101, %s104
    %p113 = scmp.eq.s32.totalorder %s14, 1
    %p114 = por %p112, %p113
    %p115 = scmp.ne.s32.totalorder %s104, %s105
    %p116 = scmp.eq.s32.totalorder %s14, 0
    %p117 = por %p115, %p116
    %p118 = scmp.ne.s32.totalorder %s104, %s105
    %p119 = scmp.eq.s32.totalorder %s15, 1
    %p120 = por %p118, %p119
    %p122 = scmp.ne.s32.totalorder %s105, %s121
    %p123 = scmp.eq.s32.totalorder %s15, 0
    %p124 = por %p122, %p123
    %p125 = scmp.le.s32.totalorder 1, %s9
    %p126 = scmp.lt.s32.totalorder %s9, 3
    %p127 = pnand %p125, %p126
    %p128 = pneg %p127
    // Predicated region
    $region9: #{_fpn_p6p7_forward.2} parent=5 // pred_check
      _
    $region10: #{_fpn_p6p7_forward.2} parent=5 // pred_check_branch
      %130 = sbr.rel (%p127) target = $region12
    $region11: #{_fpn_p6p7_forward.2} parent=5 // pred_region
      %s131 = ssub.s32 %s9, 1
      // Predicated region
      $region13: #{_fpn_p6p7_forward.2} parent=11 // pred_check
        %p132 = pneg %p68
      $region14: #{_fpn_p6p7_forward.2} parent=11 // pred_check_branch
        %134 = sbr.rel (%p132) target = $region16
      $region15: #{_fpn_p6p7_forward.2} parent=11 // pred_region
        _
      $region16: #{_fpn_p6p7_forward.2} parent=11 // pred_fallthru
        _
      // Predicated region
      $region17: #{_fpn_p6p7_forward.2} parent=11 // pred_check
        %p135 = pneg %p89
      $region18: #{_fpn_p6p7_forward.2} parent=11 // pred_check_branch
        %137 = sbr.rel (%p135) target = $region20
      $region19: #{_fpn_p6p7_forward.2} parent=11 // pred_region
        _
      $region20: #{_fpn_p6p7_forward.2} parent=11 // pred_fallthru
        _
    $region12: #{_fpn_p6p7_forward.2} parent=5 // pred_fallthru
      _
    %p138 = scmp.lt.s32.totalorder %s9, 2
    // Predicated region
    $region21: #{_fpn_p6p7_forward.2} parent=5 // pred_check
      %p139 = pneg %p138
    $region22: #{_fpn_p6p7_forward.2} parent=5 // pred_check_branch
      %141 = sbr.rel (%p139) target = $region24
    $region23: #{_fpn_p6p7_forward.2} parent=5 // pred_region
      // Predicated region
      $region25: #{_fpn_p6p7_forward.2} parent=23 // pred_check
        %p142 = pneg %p41
      $region26: #{_fpn_p6p7_forward.2} parent=23 // pred_check_branch
        %144 = sbr.rel (%p142) target = $region28
      $region27: #{_fpn_p6p7_forward.2} parent=23 // pred_region
        %p145 = scmp.lt.s32.totalorder %s16, 1
        %s146 = scalar_select %p145, %s16, 1
        %s147 = smul.addr %s146, 72
        %s148 = smul.addr %s147, 4
        %s149 = scalar_lea.vmem %s0, %s148
      $region28: #{_fpn_p6p7_forward.2} parent=23 // pred_fallthru
        _
    $region24: #{_fpn_p6p7_forward.2} parent=5 // pred_fallthru
      _
    %p150 = scmp.le.s32.totalorder 1, %s9
    %p151 = scmp.lt.s32.totalorder %s9, 3
    %p152 = pnand %p150, %p151
    %p153 = pneg %p152
    // Predicated region
    $region29: #{_fpn_p6p7_forward.2} parent=5 // pred_check
      _
    $region30: #{_fpn_p6p7_forward.2} parent=5 // pred_check_branch
      %155 = sbr.rel (%p152) target = $region32
    $region31: #{_fpn_p6p7_forward.2} parent=5 // pred_region
      %s156 = ssub.s32 %s9, 1
      %p157 = scmp.lt.s32.totalorder %s18, 1
      %s158 = scalar_select %p157, %s18, 1
      %s159 = smul.addr %s158, 72
      %s160 = smul.addr %s159, 4
      %s161 = scalar_lea.vmem %s0, %s160
      %p162 = pneg %p47
      %p163 = pneg %p44
      %p164 = pneg %p68
      %p165 = pneg %p65
      %p166 = pneg %p89
      %p167 = pneg %p86
      %p168 = pneg %p117
      %p169 = pneg %p114
      %s170 = smul.u32 8, %s19
      %p171 = scmp.lt.s32.totalorder %s18, 1
      %s172 = scalar_select %p171, %s18, 1
      %p173 = scmp.lt.s32.totalorder %s170, 7
      %s174 = scalar_select %p173, %s170, 7
      %s175 = smul.addr %s172, 8
      %s176 = sadd.s32 %s174, %s175
      %s177 = smul.addr %s176, 4
      %s178 = scalar_lea.vmem %s3, %s177
      %p179 = scmp.lt.s32.totalorder %s18, 1
      %s180 = scalar_select %p179, %s18, 1
      %s181 = smul.addr %s180, 72
      %s182 = smul.addr %s181, 4
      %s183 = scalar_lea.vmem %s0, %s182
      %s184 = smul.u32 8, %s19
      %p185 = scmp.lt.s32.totalorder %s18, 1
      %s186 = scalar_select %p185, %s18, 1
      %p187 = scmp.lt.s32.totalorder %s184, 7
      %s188 = scalar_select %p187, %s184, 7
      %s189 = smul.addr %s186, 8
      %s190 = sadd.s32 %s188, %s189
      %s191 = smul.addr %s190, 4
      %s192 = scalar_lea.vmem %s3, %s191
      %s193 = smul.u32 8, %s19
      %s195 = smul.u32 %s19, 8
      %s196 = smul.u32 %s195, 2
      %s197 = smul.addr %s196, 4
      %s198 = scalar_lea.vmem %s183, %s197
      %v199 = vld [vmem:[%s198] sm:$0xf]
      %v200 = vld [vmem:[%s198 + $0x8] sm:$0xf]
      %v201 = vld [vmem:[%s198 + $0x10] sm:$0xf]
      %v202 = vld [vmem:[%s198 + $0x18] sm:$0xf]
      %v203 = vld [vmem:[%s198 + $0x20] sm:$0xf]
      %v204 = vld [vmem:[%s198 + $0x28] sm:$0xf]
      %v205 = vld [vmem:[%s198 + $0x30] sm:$0xf]
      %v206 = vld [vmem:[%s198 + $0x38] sm:$0xf]
      %v207 = vld [vmem:[%s1] sm:$0x3]
      %s208 = sadd.s32 %s196, 18
      %s209 = smul.addr %s208, 4
      %s210 = scalar_lea.vmem %s183, %s209
      %v211 = vld [vmem:[%s210] sm:$0xf]
      %v212 = vld [vmem:[%s210 + $0x8] sm:$0xf]
      %v213 = vld [vmem:[%s210 + $0x10] sm:$0xf]
      %v214 = vld [vmem:[%s210 + $0x18] sm:$0xf]
      %v215 = vld [vmem:[%s210 + $0x20] sm:$0xf]
      %v216 = vld [vmem:[%s210 + $0x28] sm:$0xf]
      %v217 = vld [vmem:[%s210 + $0x30] sm:$0xf]
      %v218 = vld [vmem:[%s210 + $0x38] sm:$0xf]
      %s219 = scalar_lea.vmem %s1, 2
      %v220 = vld [vmem:[%s219] sm:$0x3]
      %v229 = vunpack.c.l.b16 %v211
      %v230 = vunpack.c.l.b16 %v212
      %v231 = vunpack.c.l.b16 %v213
      %v232 = vunpack.c.l.b16 %v214
      %v233 = vunpack.c.l.b16 %v215
      %v234 = vunpack.c.l.b16 %v216
      %v235 = vunpack.c.l.b16 %v217
      %v236 = vunpack.c.l.b16 %v218
      %v237 = vpack.c.b16 %v230, %v229
      %v238 = vpack.c.b16 %v232, %v231
      %v239 = vpack.c.b16 %v234, %v233
      %v240 = vpack.c.b16 %v236, %v235
      %vm241 = vcmask 31744
      %v243 = vsel %vm241, %v237, 0
      %v246 = vsel %vm241, %v238, 0
      %v249 = vsel %vm241, %v239, 0
      %v252 = vsel %vm241, %v240, 0
      %vm254 = vcmask 1041408
      %v256 = vsel %vm254, %v220, 0
      %258 = vmatprep.subr.bf16.mxu0 0
      %259 = vmatpush1.bf16.msra.mxu0 %v256
      %260 = vmatprep.subr.bf16.mxu0 0
      %261 = vmatpush1.bf16.msra.mxu0 0
      %262 = vmatprep.subr.bf16.mxu0 0
      %263 = vmatpush1.bf16.msra.mxu0 0
      %264 = vmatprep.subr.bf16.mxu0 0
      %265 = vmatpush1.bf16.msra.mxu0 0
      %266 = vmatprep.subr.bf16.mxu0 0
      %267 = vmatpush1.bf16.msra.mxu0 0
      %268 = vmatprep.subr.bf16.mxu0 0
      %269 = vmatpush1.bf16.msra.mxu0 0
      %270 = vmatprep.subr.bf16.mxu0 0
      %271 = vmatpush1.bf16.msra.mxu0 0
      %272 = vmatprep.subr.bf16.mxu0 0
      %273 = vmatpush1.bf16.msra.mxu0 0
      %274 = vmatprep.subr.bf16.mxu0 0
      %275 = vmatpush1.bf16.msra.mxu0 0
      %276 = vmatprep.subr.bf16.mxu0 0
      %277 = vmatpush1.bf16.msra.mxu0 0
      %278 = vmatprep.subr.bf16.mxu0 0
      %279 = vmatpush1.bf16.msra.mxu0 0
      %280 = vmatprep.subr.bf16.mxu0 0
      %281 = vmatpush1.bf16.msra.mxu0 0
      %282 = vmatprep.subr.bf16.mxu0 0
      %283 = vmatpush1.bf16.msra.mxu0 0
      %284 = vmatprep.subr.bf16.mxu0 0
      %285 = vmatpush1.bf16.msra.mxu0 0
      %286 = vmatprep.subr.bf16.mxu0 0
      %287 = vmatpush1.bf16.msra.mxu0 0
      %288 = vmatprep.subr.bf16.mxu0 0
      %289 = vmatpush1.bf16.msra.mxu0 0
      %290 = vmatprep.mubr.bf16.mxu0 0
      %291 = vmatmul.mubr.bf16.gmra.mrb[0].mxu0 %v243
      %v292 = vpop.f32.mrb[0].mxu0
      %v293 = vadd.f32 0.0, %v292
      %v294 = vpop.f32.mrb[0].mxu0
      %v295 = vpop.f32.mrb[0].mxu0
      %v296 = vadd.f32 0.0, %v295
      %v297 = vpop.f32.mrb[0].mxu0
      %298 = vmatprep.mubr.bf16.mxu0 0
      %299 = vmatmul.mubr.bf16.gmra.mrb[0].mxu0 %v246
      %v300 = vpop.f32.mrb[0].mxu0
      %v301 = vadd.f32 0.0, %v300
      %v302 = vpop.f32.mrb[0].mxu0
      %v303 = vpop.f32.mrb[0].mxu0
      %v304 = vadd.f32 0.0, %v303
      %v305 = vpop.f32.mrb[0].mxu0
      %306 = vmatprep.mubr.bf16.mxu0 0
      %307 = vmatmul.mubr.bf16.gmra.mrb[0].mxu0 %v249
      %v308 = vpop.f32.mrb[0].mxu0
      %v309 = vadd.f32 0.0, %v308
      %v310 = vpop.f32.mrb[0].mxu0
      %v311 = vpop.f32.mrb[0].mxu0
      %v312 = vadd.f32 0.0, %v311
      %v313 = vpop.f32.mrb[0].mxu0
      %314 = vmatprep.mubr.bf16.mxu0 0
      %315 = vmatmul.mubr.bf16.gmra.mrb[0].mxu0 %v252
      %v316 = vpop.f32.mrb[0].mxu0
      %v317 = vadd.f32 0.0, %v316
      %v318 = vpop.f32.mrb[0].mxu0
      %v319 = vpop.f32.mrb[0].mxu0
      %v320 = vadd.f32 0.0, %v319
      %v321 = vpop.f32.mrb[0].mxu0
      %322 = vdwg.mxu0
      %v331 = vunpack.c.l.b16 %v199
      %v332 = vunpack.c.l.b16 %v200
      %v333 = vunpack.c.l.b16 %v201
      %v334 = vunpack.c.l.b16 %v202
      %v335 = vunpack.c.l.b16 %v203
      %v336 = vunpack.c.l.b16 %v204
      %v337 = vunpack.c.l.b16 %v205
      %v338 = vunpack.c.l.b16 %v206
      %v339 = vpack.c.b16 %v332, %v331
      %v340 = vpack.c.b16 %v334, %v333
      %v341 = vpack.c.b16 %v336, %v335
      %v342 = vpack.c.b16 %v338, %v337
      %v344 = vsel %vm241, %v339, 0
      %v347 = vsel %vm241, %v340, 0
      %v350 = vsel %vm241, %v341, 0
      %v353 = vsel %vm241, %v342, 0
      %v356 = vsel %vm254, %v207, 0
      %358 = vmatprep.subr.bf16.mxu0 0
      %359 = vmatpush1.bf16.msra.mxu0 %v356
      %360 = vmatprep.subr.bf16.mxu0 0
      %361 = vmatpush1.bf16.msra.mxu0 0
      %362 = vmatprep.subr.bf16.mxu0 0
      %363 = vmatpush1.bf16.msra.mxu0 0
      %364 = vmatprep.subr.bf16.mxu0 0
      %365 = vmatpush1.bf16.msra.mxu0 0
      %366 = vmatprep.subr.bf16.mxu0 0
      %367 = vmatpush1.bf16.msra.mxu0 0
      %368 = vmatprep.subr.bf16.mxu0 0
      %369 = vmatpush1.bf16.msra.mxu0 0
      %370 = vmatprep.subr.bf16.mxu0 0
      %371 = vmatpush1.bf16.msra.mxu0 0
      %372 = vmatprep.subr.bf16.mxu0 0
      %373 = vmatpush1.bf16.msra.mxu0 0
      %374 = vmatprep.subr.bf16.mxu0 0
      %375 = vmatpush1.bf16.msra.mxu0 0
      %376 = vmatprep.subr.bf16.mxu0 0
      %377 = vmatpush1.bf16.msra.mxu0 0
      %378 = vmatprep.subr.bf16.mxu0 0
      %379 = vmatpush1.bf16.msra.mxu0 0
      %380 = vmatprep.subr.bf16.mxu0 0
      %381 = vmatpush1.bf16.msra.mxu0 0
      %382 = vmatprep.subr.bf16.mxu0 0
      %383 = vmatpush1.bf16.msra.mxu0 0
      %384 = vmatprep.subr.bf16.mxu0 0
      %385 = vmatpush1.bf16.msra.mxu0 0
      %386 = vmatprep.subr.bf16.mxu0 0
      %387 = vmatpush1.bf16.msra.mxu0 0
      %388 = vmatprep.subr.bf16.mxu0 0
      %389 = vmatpush1.bf16.msra.mxu0 0
      %390 = vmatprep.mubr.bf16.mxu0 0
      %391 = vmatmul.mubr.bf16.gmra.mrb[0].mxu0 %v344
      %v392 = vpop.f32.mrb[0].mxu0
      %v393 = vadd.f32 %v293, %v392
      %v394 = vpop.f32.mrb[0].mxu0
      %v395 = vpop.f32.mrb[0].mxu0
      %v396 = vadd.f32 %v296, %v395
      %v397 = vpop.f32.mrb[0].mxu0
      %398 = vmatprep.mubr.bf16.mxu0 0
      %399 = vmatmul.mubr.bf16.gmra.mrb[0].mxu0 %v347
      %v400 = vpop.f32.mrb[0].mxu0
      %v401 = vadd.f32 %v301, %v400
      %v402 = vpop.f32.mrb[0].mxu0
      %v403 = vpop.f32.mrb[0].mxu0
      %v404 = vadd.f32 %v304, %v403
      %v405 = vpop.f32.mrb[0].mxu0
      %406 = vmatprep.mubr.bf16.mxu0 0
      %407 = vmatmul.mubr.bf16.gmra.mrb[0].mxu0 %v350
      %v408 = vpop.f32.mrb[0].mxu0
      %v409 = vadd.f32 %v309, %v408
      %v410 = vpop.f32.mrb[0].mxu0
      %v411 = vpop.f32.mrb[0].mxu0
      %v412 = vadd.f32 %v312, %v411
      %v413 = vpop.f32.mrb[0].mxu0
      %414 = vmatprep.mubr.bf16.mxu0 0
      %415 = vmatmul.mubr.bf16.gmra.mrb[0].mxu0 %v353
      %v416 = vpop.f32.mrb[0].mxu0
      %v417 = vadd.f32 %v317, %v416
      %v418 = vpop.f32.mrb[0].mxu0
      %v419 = vpop.f32.mrb[0].mxu0
      %v420 = vadd.f32 %v320, %v419
      %v421 = vpop.f32.mrb[0].mxu0
      %422 = vdwg.mxu0
      %v423 = vld [vmem:[%s198] sm:$0xf]
      %v424 = vld [vmem:[%s198 + $0x4] sm:$0x1]
      %v425 = vld [vmem:[%s198 + $0x8] sm:$0xf]
      %v426 = vld [vmem:[%s198 + $0xc] sm:$0x1]
      %v427 = vld [vmem:[%s198 + $0x10] sm:$0xf]
      %v428 = vld [vmem:[%s198 + $0x14] sm:$0x1]
      %v429 = vld [vmem:[%s198 + $0x18] sm:$0xf]
      %v430 = vld [vmem:[%s198 + $0x1c] sm:$0x1]
      %v431 = vld [vmem:[%s198 + $0x20] sm:$0xf]
      %v432 = vld [vmem:[%s198 + $0x24] sm:$0x1]
      %v433 = vld [vmem:[%s198 + $0x28] sm:$0xf]
      %v434 = vld [vmem:[%s198 + $0x2c] sm:$0x1]
      %v435 = vld [vmem:[%s198 + $0x30] sm:$0xf]
      %v436 = vld [vmem:[%s198 + $0x34] sm:$0x1]
      %v437 = vld [vmem:[%s198 + $0x38] sm:$0xf]
      %v438 = vld [vmem:[%s198 + $0x3c] sm:$0x1]
      %vm439 = vsmask.f32 3328
      %vm440 = vsmask.f32 7440
      %vm441 = vmor %vm439, %vm440
      %v443 = vshrl.u32 %v423, 16
      %v445 = vrot.slane %v443, 4
      %v446 = vshll.u32 %v423, 16
      %v448 = vrot.slane %v446, 5
      %v449 = vor.u32 %v445, %v448
      %v450 = vrot.slane %v449, 4
      %v452 = vshll.u32 %v424, 16
      %v454 = vrot.slane %v452, 5
      %v455 = vsel %vm441, %v450, %v454
      %v457 = vshrl.u32 %v425, 16
      %v459 = vrot.slane %v457, 4
      %v460 = vshll.u32 %v425, 16
      %v462 = vrot.slane %v460, 5
      %v463 = vor.u32 %v459, %v462
      %v464 = vrot.slane %v463, 4
      %v466 = vshll.u32 %v426, 16
      %v468 = vrot.slane %v466, 5
      %v469 = vsel %vm441, %v464, %v468
      %v471 = vshrl.u32 %v427, 16
      %v473 = vrot.slane %v471, 4
      %v474 = vshll.u32 %v427, 16
      %v476 = vrot.slane %v474, 5
      %v477 = vor.u32 %v473, %v476
      %v478 = vrot.slane %v477, 4
      %v480 = vshll.u32 %v428, 16
      %v482 = vrot.slane %v480, 5
      %v483 = vsel %vm441, %v478, %v482
      %v485 = vshrl.u32 %v429, 16
      %v487 = vrot.slane %v485, 4
      %v488 = vshll.u32 %v429, 16
      %v490 = vrot.slane %v488, 5
      %v491 = vor.u32 %v487, %v490
      %v492 = vrot.slane %v491, 4
      %v494 = vshll.u32 %v430, 16
      %v496 = vrot.slane %v494, 5
      %v497 = vsel %vm441, %v492, %v496
      %v499 = vshrl.u32 %v431, 16
      %v501 = vrot.slane %v499, 4
      %v502 = vshll.u32 %v431, 16
      %v504 = vrot.slane %v502, 5
      %v505 = vor.u32 %v501, %v504
      %v506 = vrot.slane %v505, 4
      %v508 = vshll.u32 %v432, 16
      %v510 = vrot.slane %v508, 5
      %v511 = vsel %vm441, %v506, %v510
      %v513 = vshrl.u32 %v433, 16
      %v515 = vrot.slane %v513, 4
      %v516 = vshll.u32 %v433, 16
      %v518 = vrot.slane %v516, 5
      %v519 = vor.u32 %v515, %v518
      %v520 = vrot.slane %v519, 4
      %v522 = vshll.u32 %v434, 16
      %v524 = vrot.slane %v522, 5
      %v525 = vsel %vm441, %v520, %v524
      %v527 = vshrl.u32 %v435, 16
      %v529 = vrot.slane %v527, 4
      %v530 = vshll.u32 %v435, 16
      %v532 = vrot.slane %v530, 5
      %v533 = vor.u32 %v529, %v532
      %v534 = vrot.slane %v533, 4
      %v536 = vshll.u32 %v436, 16
      %v538 = vrot.slane %v536, 5
      %v539 = vsel %vm441, %v534, %v538
      %v541 = vshrl.u32 %v437, 16
      %v543 = vrot.slane %v541, 4
      %v544 = vshll.u32 %v437, 16
      %v546 = vrot.slane %v544, 5
      %v547 = vor.u32 %v543, %v546
      %v548 = vrot.slane %v547, 4
      %v550 = vshll.u32 %v438, 16
      %v552 = vrot.slane %v550, 5
      %v553 = vsel %vm441, %v548, %v552
      %s554 = scalar_lea.vmem %s1, 4
      %v555 = vld [vmem:[%s554] sm:$0x3]
      %v556 = vunpack.c.l.b16 %v455
      %v557 = vunpack.c.l.b16 %v469
      %v558 = vunpack.c.l.b16 %v483
      %v559 = vunpack.c.l.b16 %v497
      %v560 = vunpack.c.l.b16 %v511
      %v561 = vunpack.c.l.b16 %v525
      %v562 = vunpack.c.l.b16 %v539
      %v563 = vunpack.c.l.b16 %v553
      %v564 = vpack.c.b16 %v557, %v556
      %v565 = vpack.c.b16 %v559, %v558
      %v566 = vpack.c.b16 %v561, %v560
      %v567 = vpack.c.b16 %v563, %v562
      %v569 = vsel %vm241, %v564, 0
      %v572 = vsel %vm241, %v565, 0
      %v575 = vsel %vm241, %v566, 0
      %v578 = vsel %vm241, %v567, 0
      %v581 = vsel %vm254, %v555, 0
      %583 = vmatprep.subr.bf16.mxu0 0
      %584 = vmatpush1.bf16.msra.mxu0 %v581
      %585 = vmatprep.subr.bf16.mxu0 0
      %586 = vmatpush1.bf16.msra.mxu0 0
      %587 = vmatprep.subr.bf16.mxu0 0
      %588 = vmatpush1.bf16.msra.mxu0 0
      %589 = vmatprep.subr.bf16.mxu0 0
      %590 = vmatpush1.bf16.msra.mxu0 0
      %591 = vmatprep.subr.bf16.mxu0 0
      %592 = vmatpush1.bf16.msra.mxu0 0
      %593 = vmatprep.subr.bf16.mxu0 0
      %594 = vmatpush1.bf16.msra.mxu0 0
      %595 = vmatprep.subr.bf16.mxu0 0
      %596 = vmatpush1.bf16.msra.mxu0 0
      %597 = vmatprep.subr.bf16.mxu0 0
      %598 = vmatpush1.bf16.msra.mxu0 0
      %599 = vmatprep.subr.bf16.mxu0 0
      %600 = vmatpush1.bf16.msra.mxu0 0
      %601 = vmatprep.subr.bf16.mxu0 0
      %602 = vmatpush1.bf16.msra.mxu0 0
      %603 = vmatprep.subr.bf16.mxu0 0
      %604 = vmatpush1.bf16.msra.mxu0 0
      %605 = vmatprep.subr.bf16.mxu0 0
      %606 = vmatpush1.bf16.msra.mxu0 0
      %607 = vmatprep.subr.bf16.mxu0 0
      %608 = vmatpush1.bf16.msra.mxu0 0
      %609 = vmatprep.subr.bf16.mxu0 0
      %610 = vmatpush1.bf16.msra.mxu0 0
      %611 = vmatprep.subr.bf16.mxu0 0
      %612 = vmatpush1.bf16.msra.mxu0 0
      %613 = vmatprep.subr.bf16.mxu0 0
      %614 = vmatpush1.bf16.msra.mxu0 0
      %615 = vmatprep.mubr.bf16.mxu0 0
      %616 = vmatmul.mubr.bf16.gmra.mrb[0].mxu0 %v569
      %v617 = vpop.f32.mrb[0].mxu0
      %v618 = vadd.f32 0.0, %v617
      %v619 = vpop.f32.mrb[0].mxu0
      %v620 = vpop.f32.mrb[0].mxu0
      %v621 = vadd.f32 0.0, %v620
      %v622 = vpop.f32.mrb[0].mxu0
      %623 = vmatprep.mubr.bf16.mxu0 0
      %624 = vmatmul.mubr.bf16.gmra.mrb[0].mxu0 %v572
      %v625 = vpop.f32.mrb[0].mxu0
      %v626 = vadd.f32 0.0, %v625
      %v627 = vpop.f32.mrb[0].mxu0
      %v628 = vpop.f32.mrb[0].mxu0
      %v629 = vadd.f32 0.0, %v628
      %v630 = vpop.f32.mrb[0].mxu0
      %631 = vmatprep.mubr.bf16.mxu0 0
      %632 = vmatmul.mubr.bf16.gmra.mrb[0].mxu0 %v575
      %v633 = vpop.f32.mrb[0].mxu0
      %v634 = vadd.f32 0.0, %v633
      %v635 = vpop.f32.mrb[0].mxu0
      %v636 = vpop.f32.mrb[0].mxu0
      %v637 = vadd.f32 0.0, %v636
      %v638 = vpop.f32.mrb[0].mxu0
      %639 = vmatprep.mubr.bf16.mxu0 0
      %640 = vmatmul.mubr.bf16.gmra.mrb[0].mxu0 %v578
      %v641 = vpop.f32.mrb[0].mxu0
      %v642 = vadd.f32 0.0, %v641
      %v643 = vpop.f32.mrb[0].mxu0
      %v644 = vpop.f32.mrb[0].mxu0
      %v645 = vadd.f32 0.0, %v644
      %v646 = vpop.f32.mrb[0].mxu0
      %647 = vdwg.mxu0
      %v648 = vadd.f32 %v393, %v618
      %v649 = vadd.f32 %v396, %v621
      %v650 = vadd.f32 %v401, %v626
      %v651 = vadd.f32 %v404, %v629
      %v652 = vadd.f32 %v409, %v634
      %v653 = vadd.f32 %v412, %v637
      %v654 = vadd.f32 %v417, %v642
      %v655 = vadd.f32 %v420, %v645
      %s656 = sadd.s32 %s196, 36
      %s657 = smul.addr %s656, 4
      %s658 = scalar_lea.vmem %s183, %s657
      %v659 = vld [vmem:[%s658] sm:$0xf]
      %v660 = vld [vmem:[%s658 + $0x8] sm:$0xf]
      %v661 = vld [vmem:[%s658 + $0x10] sm:$0xf]
      %v662 = vld [vmem:[%s658 + $0x18] sm:$0xf]
      %v663 = vld [vmem:[%s658 + $0x20] sm:$0xf]
      %v664 = vld [vmem:[%s658 + $0x28] sm:$0xf]
      %v665 = vld [vmem:[%s658 + $0x30] sm:$0xf]
      %v666 = vld [vmem:[%s658 + $0x38] sm:$0xf]
      %s667 = scalar_lea.vmem %s1, 6
      %v668 = vld [vmem:[%s667] sm:$0x3]
      %v677 = vunpack.c.l.b16 %v659
      %v678 = vunpack.c.l.b16 %v660
      %v679 = vunpack.c.l.b16 %v661
      %v680 = vunpack.c.l.b16 %v662
      %v681 = vunpack.c.l.b16 %v663
      %v682 = vunpack.c.l.b16 %v664
      %v683 = vunpack.c.l.b16 %v665
      %v684 = vunpack.c.l.b16 %v666
      %v685 = vpack.c.b16 %v678, %v677
      %v686 = vpack.c.b16 %v680, %v679
      %v687 = vpack.c.b16 %v682, %v681
      %v688 = vpack.c.b16 %v684, %v683
      %v690 = vsel %vm241, %v685, 0
      %v693 = vsel %vm241, %v686, 0
      %v696 = vsel %vm241, %v687, 0
      %v699 = vsel %vm241, %v688, 0
      %v702 = vsel %vm254, %v668, 0
      %704 = vmatprep.subr.bf16.mxu0 0
      %705 = vmatpush1.bf16.msra.mxu0 %v702
      %706 = vmatprep.subr.bf16.mxu0 0
      %707 = vmatpush1.bf16.msra.mxu0 0
      %708 = vmatprep.subr.bf16.mxu0 0
      %709 = vmatpush1.bf16.msra.mxu0 0
      %710 = vmatprep.subr.bf16.mxu0 0
      %711 = vmatpush1.bf16.msra.mxu0 0
      %712 = vmatprep.subr.bf16.mxu0 0
      %713 = vmatpush1.bf16.msra.mxu0 0
      %714 = vmatprep.subr.bf16.mxu0 0
      %715 = vmatpush1.bf16.msra.mxu0 0
      %716 = vmatprep.subr.bf16.mxu0 0
      %717 = vmatpush1.bf16.msra.mxu0 0
      %718 = vmatprep.subr.bf16.mxu0 0
      %719 = vmatpush1.bf16.msra.mxu0 0
      %720 = vmatprep.subr.bf16.mxu0 0
      %721 = vmatpush1.bf16.msra.mxu0 0
      %722 = vmatprep.subr.bf16.mxu0 0
      %723 = vmatpush1.bf16.msra.mxu0 0
      %724 = vmatprep.subr.bf16.mxu0 0
      %725 = vmatpush1.bf16.msra.mxu0 0
      %726 = vmatprep.subr.bf16.mxu0 0
      %727 = vmatpush1.bf16.msra.mxu0 0
      %728 = vmatprep.subr.bf16.mxu0 0
      %729 = vmatpush1.bf16.msra.mxu0 0
      %730 = vmatprep.subr.bf16.mxu0 0
      %731 = vmatpush1.bf16.msra.mxu0 0
      %732 = vmatprep.subr.bf16.mxu0 0
      %733 = vmatpush1.bf16.msra.mxu0 0
      %734 = vmatprep.subr.bf16.mxu0 0
      %735 = vmatpush1.bf16.msra.mxu0 0
      %736 = vmatprep.mubr.bf16.mxu0 0
      %737 = vmatmul.mubr.bf16.gmra.mrb[0].mxu0 %v690
      %v738 = vpop.f32.mrb[0].mxu0
      %v739 = vadd.f32 0.0, %v738
      %v740 = vpop.f32.mrb[0].mxu0
      %v741 = vpop.f32.mrb[0].mxu0
      %v742 = vadd.f32 0.0, %v741
      %v743 = vpop.f32.mrb[0].mxu0
      %744 = vmatprep.mubr.bf16.mxu0 0
      %745 = vmatmul.mubr.bf16.gmra.mrb[0].mxu0 %v693
      %v746 = vpop.f32.mrb[0].mxu0
      %v747 = vadd.f32 0.0, %v746
      %v748 = vpop.f32.mrb[0].mxu0
      %v749 = vpop.f32.mrb[0].mxu0
      %v750 = vadd.f32 0.0, %v749
      %v751 = vpop.f32.mrb[0].mxu0
      %752 = vmatprep.mubr.bf16.mxu0 0
      %753 = vmatmul.mubr.bf16.gmra.mrb[0].mxu0 %v696
      %v754 = vpop.f32.mrb[0].mxu0
      %v755 = vadd.f32 0.0, %v754
      %v756 = vpop.f32.mrb[0].mxu0
      %v757 = vpop.f32.mrb[0].mxu0
      %v758 = vadd.f32 0.0, %v757
      %v759 = vpop.f32.mrb[0].mxu0
      %760 = vmatprep.mubr.bf16.mxu0 0
      %761 = vmatmul.mubr.bf16.gmra.mrb[0].mxu0 %v699
      %v762 = vpop.f32.mrb[0].mxu0
      %v763 = vadd.f32 0.0, %v762
      %v764 = vpop.f32.mrb[0].mxu0
      %v765 = vpop.f32.mrb[0].mxu0
      %v766 = vadd.f32 0.0, %v765
      %v767 = vpop.f32.mrb[0].mxu0
      %768 = vdwg.mxu0
      %v769 = vadd.f32 %v648, %v739
      %v770 = vadd.f32 %v649, %v742
      %v771 = vadd.f32 %v650, %v747
      %v772 = vadd.f32 %v651, %v750
      %v773 = vadd.f32 %v652, %v755
      %v774 = vadd.f32 %v653, %v758
      %v775 = vadd.f32 %v654, %v763
      %v776 = vadd.f32 %v655, %v766
      %s777 = sadd.s32 %s196, 54
      %s778 = smul.addr %s777, 4
      %s779 = scalar_lea.vmem %s183, %s778
      %v780 = vld [vmem:[%s779] sm:$0xf]
      %v781 = vld [vmem:[%s779 + $0x8] sm:$0xf]
      %v782 = vld [vmem:[%s779 + $0x10] sm:$0xf]
      %v783 = vld [vmem:[%s779 + $0x18] sm:$0xf]
      %v784 = vld [vmem:[%s779 + $0x20] sm:$0xf]
      %v785 = vld [vmem:[%s779 + $0x28] sm:$0xf]
      %v786 = vld [vmem:[%s779 + $0x30] sm:$0xf]
      %v787 = vld [vmem:[%s779 + $0x38] sm:$0xf]
      %s788 = scalar_lea.vmem %s1, 8
      %v789 = vld [vmem:[%s788] sm:$0x3]
      %v798 = vunpack.c.l.b16 %v780
      %v799 = vunpack.c.l.b16 %v781
      %v800 = vunpack.c.l.b16 %v782
      %v801 = vunpack.c.l.b16 %v783
      %v802 = vunpack.c.l.b16 %v784
      %v803 = vunpack.c.l.b16 %v785
      %v804 = vunpack.c.l.b16 %v786
      %v805 = vunpack.c.l.b16 %v787
      %v806 = vpack.c.b16 %v799, %v798
      %v807 = vpack.c.b16 %v801, %v800
      %v808 = vpack.c.b16 %v803, %v802
      %v809 = vpack.c.b16 %v805, %v804
      %v811 = vsel %vm241, %v806, 0
      %v814 = vsel %vm241, %v807, 0
      %v817 = vsel %vm241, %v808, 0
      %v820 = vsel %vm241, %v809, 0
      %v823 = vsel %vm254, %v789, 0
      %825 = vmatprep.subr.bf16.mxu0 0
      %826 = vmatpush1.bf16.msra.mxu0 %v823
      %827 = vmatprep.subr.bf16.mxu0 0
      %828 = vmatpush1.bf16.msra.mxu0 0
      %829 = vmatprep.subr.bf16.mxu0 0
      %830 = vmatpush1.bf16.msra.mxu0 0
      %831 = vmatprep.subr.bf16.mxu0 0
      %832 = vmatpush1.bf16.msra.mxu0 0
      %833 = vmatprep.subr.bf16.mxu0 0
      %834 = vmatpush1.bf16.msra.mxu0 0
      %835 = vmatprep.subr.bf16.mxu0 0
      %836 = vmatpush1.bf16.msra.mxu0 0
      %837 = vmatprep.subr.bf16.mxu0 0
      %838 = vmatpush1.bf16.msra.mxu0 0
      %839 = vmatprep.subr.bf16.mxu0 0
      %840 = vmatpush1.bf16.msra.mxu0 0
      %841 = vmatprep.subr.bf16.mxu0 0
      %842 = vmatpush1.bf16.msra.mxu0 0
      %843 = vmatprep.subr.bf16.mxu0 0
      %844 = vmatpush1.bf16.msra.mxu0 0
      %845 = vmatprep.subr.bf16.mxu0 0
      %846 = vmatpush1.bf16.msra.mxu0 0
      %847 = vmatprep.subr.bf16.mxu0 0
      %848 = vmatpush1.bf16.msra.mxu0 0
      %849 = vmatprep.subr.bf16.mxu0 0
      %850 = vmatpush1.bf16.msra.mxu0 0
      %851 = vmatprep.subr.bf16.mxu0 0
      %852 = vmatpush1.bf16.msra.mxu0 0
      %853 = vmatprep.subr.bf16.mxu0 0
      %854 = vmatpush1.bf16.msra.mxu0 0
      %855 = vmatprep.subr.bf16.mxu0 0
      %856 = vmatpush1.bf16.msra.mxu0 0
      %857 = vmatprep.mubr.bf16.mxu0 0
      %858 = vmatmul.mubr.bf16.gmra.mrb[0].mxu0 %v811
      %v859 = vpop.f32.mrb[0].mxu0
      %v860 = vadd.f32 0.0, %v859
      %v861 = vpop.f32.mrb[0].mxu0
      %v862 = vpop.f32.mrb[0].mxu0
      %v863 = vadd.f32 0.0, %v862
      %v864 = vpop.f32.mrb[0].mxu0
      %865 = vmatprep.mubr.bf16.mxu0 0
      %866 = vmatmul.mubr.bf16.gmra.mrb[0].mxu0 %v814
      %v867 = vpop.f32.mrb[0].mxu0
      %v868 = vadd.f32 0.0, %v867
      %v869 = vpop.f32.mrb[0].mxu0
      %v870 = vpop.f32.mrb[0].mxu0
      %v871 = vadd.f32 0.0, %v870
      %v872 = vpop.f32.mrb[0].mxu0
      %873 = vmatprep.mubr.bf16.mxu0 0
      %874 = vmatmul.mubr.bf16.gmra.mrb[0].mxu0 %v817
      %v875 = vpop.f32.mrb[0].mxu0
      %v876 = vadd.f32 0.0, %v875
      %v877 = vpop.f32.mrb[0].mxu0
      %v878 = vpop.f32.mrb[0].mxu0
      %v879 = vadd.f32 0.0, %v878
      %v880 = vpop.f32.mrb[0].mxu0
      %881 = vmatprep.mubr.bf16.mxu0 0
      %882 = vmatmul.mubr.bf16.gmra.mrb[0].mxu0 %v820
      %v883 = vpop.f32.mrb[0].mxu0
      %v884 = vadd.f32 0.0, %v883
      %v885 = vpop.f32.mrb[0].mxu0
      %v886 = vpop.f32.mrb[0].mxu0
      %v887 = vadd.f32 0.0, %v886
      %v888 = vpop.f32.mrb[0].mxu0
      %889 = vdwg.mxu0
      %v890 = vadd.f32 %v769, %v860
      %v891 = vadd.f32 %v770, %v863
      %v892 = vadd.f32 %v771, %v868
      %v893 = vadd.f32 %v772, %v871
      %v894 = vadd.f32 %v773, %v876
      %v895 = vadd.f32 %v774, %v879
      %v896 = vadd.f32 %v775, %v884
      %v897 = vadd.f32 %v776, %v887
      %v898 = vld [vmem:[%s658] sm:$0xf]
      %v899 = vld [vmem:[%s658 + $0x4] sm:$0x1]
      %v900 = vld [vmem:[%s658 + $0x8] sm:$0xf]
      %v901 = vld [vmem:[%s658 + $0xc] sm:$0x1]
      %v902 = vld [vmem:[%s658 + $0x10] sm:$0xf]
      %v903 = vld [vmem:[%s658 + $0x14] sm:$0x1]
      %v904 = vld [vmem:[%s658 + $0x18] sm:$0xf]
      %v905 = vld [vmem:[%s658 + $0x1c] sm:$0x1]
      %v906 = vld [vmem:[%s658 + $0x20] sm:$0xf]
      %v907 = vld [vmem:[%s658 + $0x24] sm:$0x1]
      %v908 = vld [vmem:[%s658 + $0x28] sm:$0xf]
      %v909 = vld [vmem:[%s658 + $0x2c] sm:$0x1]
      %v910 = vld [vmem:[%s658 + $0x30] sm:$0xf]
      %v911 = vld [vmem:[%s658 + $0x34] sm:$0x1]
      %v912 = vld [vmem:[%s658 + $0x38] sm:$0xf]
      %v913 = vld [vmem:[%s658 + $0x3c] sm:$0x1]
      %v915 = vshrl.u32 %v898, 16
      %v917 = vrot.slane %v915, 4
      %v918 = vshll.u32 %v898, 16
      %v920 = vrot.slane %v918, 5
      %v921 = vor.u32 %v917, %v920
      %v922 = vrot.slane %v921, 4
      %v924 = vshll.u32 %v899, 16
      %v926 = vrot.slane %v924, 5
      %v927 = vsel %vm441, %v922, %v926
      %v929 = vshrl.u32 %v900, 16
      %v931 = vrot.slane %v929, 4
      %v932 = vshll.u32 %v900, 16
      %v934 = vrot.slane %v932, 5
      %v935 = vor.u32 %v931, %v934
      %v936 = vrot.slane %v935, 4
      %v938 = vshll.u32 %v901, 16
      %v940 = vrot.slane %v938, 5
      %v941 = vsel %vm441, %v936, %v940
      %v943 = vshrl.u32 %v902, 16
      %v945 = vrot.slane %v943, 4
      %v946 = vshll.u32 %v902, 16
      %v948 = vrot.slane %v946, 5
      %v949 = vor.u32 %v945, %v948
      %v950 = vrot.slane %v949, 4
      %v952 = vshll.u32 %v903, 16
      %v954 = vrot.slane %v952, 5
      %v955 = vsel %vm441, %v950, %v954
      %v957 = vshrl.u32 %v904, 16
      %v959 = vrot.slane %v957, 4
      %v960 = vshll.u32 %v904, 16
      %v962 = vrot.slane %v960, 5
      %v963 = vor.u32 %v959, %v962
      %v964 = vrot.slane %v963, 4
      %v966 = vshll.u32 %v905, 16
      %v968 = vrot.slane %v966, 5
      %v969 = vsel %vm441, %v964, %v968
      %v971 = vshrl.u32 %v906, 16
      %v973 = vrot.slane %v971, 4
      %v974 = vshll.u32 %v906, 16
      %v976 = vrot.slane %v974, 5
      %v977 = vor.u32 %v973, %v976
      %v978 = vrot.slane %v977, 4
      %v980 = vshll.u32 %v907, 16
      %v982 = vrot.slane %v980, 5
      %v983 = vsel %vm441, %v978, %v982
      %v985 = vshrl.u32 %v908, 16
      %v987 = vrot.slane %v985, 4
      %v988 = vshll.u32 %v908, 16
      %v990 = vrot.slane %v988, 5
      %v991 = vor.u32 %v987, %v990
      %v992 = vrot.slane %v991, 4
      %v994 = vshll.u32 %v909, 16
      %v996 = vrot.slane %v994, 5
      %v997 = vsel %vm441, %v992, %v996
      %v999 = vshrl.u32 %v910, 16
      %v1001 = vrot.slane %v999, 4
      %v1002 = vshll.u32 %v910, 16
      %v1004 = vrot.slane %v1002, 5
      %v1005 = vor.u32 %v1001, %v1004
      %v1006 = vrot.slane %v1005, 4
      %v1008 = vshll.u32 %v911, 16
      %v1010 = vrot.slane %v1008, 5
      %v1011 = vsel %vm441, %v1006, %v1010
      %v1013 = vshrl.u32 %v912, 16
      %v1015 = vrot.slane %v1013, 4
      %v1016 = vshll.u32 %v912, 16
      %v1018 = vrot.slane %v1016, 5
      %v1019 = vor.u32 %v1015, %v1018
      %v1020 = vrot.slane %v1019, 4
      %v1022 = vshll.u32 %v913, 16
      %v1024 = vrot.slane %v1022, 5
      %v1025 = vsel %vm441, %v1020, %v1024
      %s1026 = scalar_lea.vmem %s1, 10
      %v1027 = vld [vmem:[%s1026] sm:$0x3]
      %v1028 = vunpack.c.l.b16 %v927
      %v1029 = vunpack.c.l.b16 %v941
      %v1030 = vunpack.c.l.b16 %v955
      %v1031 = vunpack.c.l.b16 %v969
      %v1032 = vunpack.c.l.b16 %v983
      %v1033 = vunpack.c.l.b16 %v997
      %v1034 = vunpack.c.l.b16 %v1011
      %v1035 = vunpack.c.l.b16 %v1025
      %v1036 = vpack.c.b16 %v1029, %v1028
      %v1037 = vpack.c.b16 %v1031, %v1030
      %v1038 = vpack.c.b16 %v1033, %v1032
      %v1039 = vpack.c.b16 %v1035, %v1034
      %v1041 = vsel %vm241, %v1036, 0
      %v1044 = vsel %vm241, %v1037, 0
      %v1047 = vsel %vm241, %v1038, 0
      %v1050 = vsel %vm241, %v1039, 0
      %v1053 = vsel %vm254, %v1027, 0
      %1055 = vmatprep.subr.bf16.mxu0 0
      %1056 = vmatpush1.bf16.msra.mxu0 %v1053
      %1057 = vmatprep.subr.bf16.mxu0 0
      %1058 = vmatpush1.bf16.msra.mxu0 0
      %1059 = vmatprep.subr.bf16.mxu0 0
      %1060 = vmatpush1.bf16.msra.mxu0 0
      %1061 = vmatprep.subr.bf16.mxu0 0
      %1062 = vmatpush1.bf16.msra.mxu0 0
      %1063 = vmatprep.subr.bf16.mxu0 0
      %1064 = vmatpush1.bf16.msra.mxu0 0
      %1065 = vmatprep.subr.bf16.mxu0 0
      %1066 = vmatpush1.bf16.msra.mxu0 0
      %1067 = vmatprep.subr.bf16.mxu0 0
      %1068 = vmatpush1.bf16.msra.mxu0 0
      %1069 = vmatprep.subr.bf16.mxu0 0
      %1070 = vmatpush1.bf16.msra.mxu0 0
      %1071 = vmatprep.subr.bf16.mxu0 0
      %1072 = vmatpush1.bf16.msra.mxu0 0
      %1073 = vmatprep.subr.bf16.mxu0 0
      %1074 = vmatpush1.bf16.msra.mxu0 0
      %1075 = vmatprep.subr.bf16.mxu0 0
      %1076 = vmatpush1.bf16.msra.mxu0 0
      %1077 = vmatprep.subr.bf16.mxu0 0
      %1078 = vmatpush1.bf16.msra.mxu0 0
      %1079 = vmatprep.subr.bf16.mxu0 0
      %1080 = vmatpush1.bf16.msra.mxu0 0
      %1081 = vmatprep.subr.bf16.mxu0 0
      %1082 = vmatpush1.bf16.msra.mxu0 0
      %1083 = vmatprep.subr.bf16.mxu0 0
      %1084 = vmatpush1.bf16.msra.mxu0 0
      %1085 = vmatprep.subr.bf16.mxu0 0
      %1086 = vmatpush1.bf16.msra.mxu0 0
      %1087 = vmatprep.mubr.bf16.mxu0 0
      %1088 = vmatmul.mubr.bf16.gmra.mrb[0].mxu0 %v1041
      %v1089 = vpop.f32.mrb[0].mxu0
      %v1090 = vadd.f32 0.0, %v1089
      %v1091 = vpop.f32.mrb[0].mxu0
      %v1092 = vpop.f32.mrb[0].mxu0
      %v1093 = vadd.f32 0.0, %v1092
      %v1094 = vpop.f32.mrb[0].mxu0
      %1095 = vmatprep.mubr.bf16.mxu0 0
      %1096 = vmatmul.mubr.bf16.gmra.mrb[0].mxu0 %v1044
      %v1097 = vpop.f32.mrb[0].mxu0
      %v1098 = vadd.f32 0.0, %v1097
      %v1099 = vpop.f32.mrb[0].mxu0
      %v1100 = vpop.f32.mrb[0].mxu0
      %v1101 = vadd.f32 0.0, %v1100
      %v1102 = vpop.f32.mrb[0].mxu0
      %1103 = vmatprep.mubr.bf16.mxu0 0
      %1104 = vmatmul.mubr.bf16.gmra.mrb[0].mxu0 %v1047
      %v1105 = vpop.f32.mrb[0].mxu0
      %v1106 = vadd.f32 0.0, %v1105
      %v1107 = vpop.f32.mrb[0].mxu0
      %v1108 = vpop.f32.mrb[0].mxu0
      %v1109 = vadd.f32 0.0, %v1108
      %v1110 = vpop.f32.mrb[0].mxu0
      %1111 = vmatprep.mubr.bf16.mxu0 0
      %1112 = vmatmul.mubr.bf16.gmra.mrb[0].mxu0 %v1050
      %v1113 = vpop.f32.mrb[0].mxu0
      %v1114 = vadd.f32 0.0, %v1113
      %v1115 = vpop.f32.mrb[0].mxu0
      %v1116 = vpop.f32.mrb[0].mxu0
      %v1117 = vadd.f32 0.0, %v1116
      %v1118 = vpop.f32.mrb[0].mxu0
      %1119 = vdwg.mxu0
      %v1120 = vadd.f32 %v890, %v1090
      %v1121 = vadd.f32 %v891, %v1093
      %v1122 = vadd.f32 %v892, %v1098
      %v1123 = vadd.f32 %v893, %v1101
      %v1124 = vadd.f32 %v894, %v1106
      %v1125 = vadd.f32 %v895, %v1109
      %v1126 = vadd.f32 %v896, %v1114
      %v1127 = vadd.f32 %v897, %v1117
      %s1128 = sadd.s32 %s195, 1
      %s1129 = smul.u32 %s1128, 2
      %s1130 = smul.addr %s1129, 4
      %s1131 = scalar_lea.vmem %s183, %s1130
      %v1132 = vld [vmem:[%s1131] sm:$0xf]
      %v1133 = vld [vmem:[%s1131 + $0x8] sm:$0xf]
      %v1134 = vld [vmem:[%s1131 + $0x10] sm:$0xf]
      %v1135 = vld [vmem:[%s1131 + $0x18] sm:$0xf]
      %v1136 = vld [vmem:[%s1131 + $0x20] sm:$0xf]
      %v1137 = vld [vmem:[%s1131 + $0x28] sm:$0xf]
      %v1138 = vld [vmem:[%s1131 + $0x30] sm:$0xf]
      %v1139 = vld [vmem:[%s1131 + $0x38] sm:$0xf]
      %s1140 = scalar_lea.vmem %s1, 12
      %v1141 = vld [vmem:[%s1140] sm:$0x3]
      %v1150 = vunpack.c.l.b16 %v1132
      %v1151 = vunpack.c.l.b16 %v1133
      %v1152 = vunpack.c.l.b16 %v1134
      %v1153 = vunpack.c.l.b16 %v1135
      %v1154 = vunpack.c.l.b16 %v1136
      %v1155 = vunpack.c.l.b16 %v1137
      %v1156 = vunpack.c.l.b16 %v1138
      %v1157 = vunpack.c.l.b16 %v1139
      %v1158 = vpack.c.b16 %v1151, %v1150
      %v1159 = vpack.c.b16 %v1153, %v1152
      %v1160 = vpack.c.b16 %v1155, %v1154
      %v1161 = vpack.c.b16 %v1157, %v1156
      %v1163 = vsel %vm241, %v1158, 0
      %v1166 = vsel %vm241, %v1159, 0
      %v1169 = vsel %vm241, %v1160, 0
      %v1172 = vsel %vm241, %v1161, 0
      %v1175 = vsel %vm254, %v1141, 0
      %1177 = vmatprep.subr.bf16.mxu0 0
      %1178 = vmatpush1.bf16.msra.mxu0 %v1175
      %1179 = vmatprep.subr.bf16.mxu0 0
      %1180 = vmatpush1.bf16.msra.mxu0 0
      %1181 = vmatprep.subr.bf16.mxu0 0
      %1182 = vmatpush1.bf16.msra.mxu0 0
      %1183 = vmatprep.subr.bf16.mxu0 0
      %1184 = vmatpush1.bf16.msra.mxu0 0
      %1185 = vmatprep.subr.bf16.mxu0 0
      %1186 = vmatpush1.bf16.msra.mxu0 0
      %1187 = vmatprep.subr.bf16.mxu0 0
      %1188 = vmatpush1.bf16.msra.mxu0 0
      %1189 = vmatprep.subr.bf16.mxu0 0
      %1190 = vmatpush1.bf16.msra.mxu0 0
      %1191 = vmatprep.subr.bf16.mxu0 0
      %1192 = vmatpush1.bf16.msra.mxu0 0
      %1193 = vmatprep.subr.bf16.mxu0 0
      %1194 = vmatpush1.bf16.msra.mxu0 0
      %1195 = vmatprep.subr.bf16.mxu0 0
      %1196 = vmatpush1.bf16.msra.mxu0 0
      %1197 = vmatprep.subr.bf16.mxu0 0
      %1198 = vmatpush1.bf16.msra.mxu0 0
      %1199 = vmatprep.subr.bf16.mxu0 0
      %1200 = vmatpush1.bf16.msra.mxu0 0
      %1201 = vmatprep.subr.bf16.mxu0 0
      %1202 = vmatpush1.bf16.msra.mxu0 0
      %1203 = vmatprep.subr.bf16.mxu0 0
      %1204 = vmatpush1.bf16.msra.mxu0 0
      %1205 = vmatprep.subr.bf16.mxu0 0
      %1206 = vmatpush1.bf16.msra.mxu0 0
      %1207 = vmatprep.subr.bf16.mxu0 0
      %1208 = vmatpush1.bf16.msra.mxu0 0
      %1209 = vmatprep.mubr.bf16.mxu0 0
      %1210 = vmatmul.mubr.bf16.gmra.mrb[0].mxu0 %v1163
      %v1211 = vpop.f32.mrb[0].mxu0
      %v1212 = vadd.f32 0.0, %v1211
      %v1213 = vpop.f32.mrb[0].mxu0
      %v1214 = vpop.f32.mrb[0].mxu0
      %v1215 = vadd.f32 0.0, %v1214
      %v1216 = vpop.f32.mrb[0].mxu0
      %1217 = vmatprep.mubr.bf16.mxu0 0
      %1218 = vmatmul.mubr.bf16.gmra.mrb[0].mxu0 %v1166
      %v1219 = vpop.f32.mrb[0].mxu0
      %v1220 = vadd.f32 0.0, %v1219
      %v1221 = vpop.f32.mrb[0].mxu0
      %v1222 = vpop.f32.mrb[0].mxu0
      %v1223 = vadd.f32 0.0, %v1222
      %v1224 = vpop.f32.mrb[0].mxu0
      %1225 = vmatprep.mubr.bf16.mxu0 0
      %1226 = vmatmul.mubr.bf16.gmra.mrb[0].mxu0 %v1169
      %v1227 = vpop.f32.mrb[0].mxu0
      %v1228 = vadd.f32 0.0, %v1227
      %v1229 = vpop.f32.mrb[0].mxu0
      %v1230 = vpop.f32.mrb[0].mxu0
      %v1231 = vadd.f32 0.0, %v1230
      %v1232 = vpop.f32.mrb[0].mxu0
      %1233 = vmatprep.mubr.bf16.mxu0 0
      %1234 = vmatmul.mubr.bf16.gmra.mrb[0].mxu0 %v1172
      %v1235 = vpop.f32.mrb[0].mxu0
      %v1236 = vadd.f32 0.0, %v1235
      %v1237 = vpop.f32.mrb[0].mxu0
      %v1238 = vpop.f32.mrb[0].mxu0
      %v1239 = vadd.f32 0.0, %v1238
      %v1240 = vpop.f32.mrb[0].mxu0
      %1241 = vdwg.mxu0
      %v1242 = vadd.f32 %v1120, %v1212
      %v1243 = vadd.f32 %v1121, %v1215
      %v1244 = vadd.f32 %v1122, %v1220
      %v1245 = vadd.f32 %v1123, %v1223
      %v1246 = vadd.f32 %v1124, %v1228
      %v1247 = vadd.f32 %v1125, %v1231
      %v1248 = vadd.f32 %v1126, %v1236
      %v1249 = vadd.f32 %v1127, %v1239
      %s1250 = sadd.s32 %s1129, 18
      %s1251 = smul.addr %s1250, 4
      %s1252 = scalar_lea.vmem %s183, %s1251
      %v1253 = vld [vmem:[%s1252] sm:$0xf]
      %v1254 = vld [vmem:[%s1252 + $0x8] sm:$0xf]
      %v1255 = vld [vmem:[%s1252 + $0x10] sm:$0xf]
      %v1256 = vld [vmem:[%s1252 + $0x18] sm:$0xf]
      %v1257 = vld [vmem:[%s1252 + $0x20] sm:$0xf]
      %v1258 = vld [vmem:[%s1252 + $0x28] sm:$0xf]
      %v1259 = vld [vmem:[%s1252 + $0x30] sm:$0xf]
      %v1260 = vld [vmem:[%s1252 + $0x38] sm:$0xf]
      %s1261 = scalar_lea.vmem %s1, 14
      %v1262 = vld [vmem:[%s1261] sm:$0x3]
      %v1271 = vunpack.c.l.b16 %v1253
      %v1272 = vunpack.c.l.b16 %v1254
      %v1273 = vunpack.c.l.b16 %v1255
      %v1274 = vunpack.c.l.b16 %v1256
      %v1275 = vunpack.c.l.b16 %v1257
      %v1276 = vunpack.c.l.b16 %v1258
      %v1277 = vunpack.c.l.b16 %v1259
      %v1278 = vunpack.c.l.b16 %v1260
      %v1279 = vpack.c.b16 %v1272, %v1271
      %v1280 = vpack.c.b16 %v1274, %v1273
      %v1281 = vpack.c.b16 %v1276, %v1275
      %v1282 = vpack.c.b16 %v1278, %v1277
      %v1284 = vsel %vm241, %v1279, 0
      %v1287 = vsel %vm241, %v1280, 0
      %v1290 = vsel %vm241, %v1281, 0
      %v1293 = vsel %vm241, %v1282, 0
      %v1296 = vsel %vm254, %v1262, 0
      %1298 = vmatprep.subr.bf16.mxu0 0
      %1299 = vmatpush1.bf16.msra.mxu0 %v1296
      %1300 = vmatprep.subr.bf16.mxu0 0
      %1301 = vmatpush1.bf16.msra.mxu0 0
      %1302 = vmatprep.subr.bf16.mxu0 0
      %1303 = vmatpush1.bf16.msra.mxu0 0
      %1304 = vmatprep.subr.bf16.mxu0 0
      %1305 = vmatpush1.bf16.msra.mxu0 0
      %1306 = vmatprep.subr.bf16.mxu0 0
      %1307 = vmatpush1.bf16.msra.mxu0 0
      %1308 = vmatprep.subr.bf16.mxu0 0
      %1309 = vmatpush1.bf16.msra.mxu0 0
      %1310 = vmatprep.subr.bf16.mxu0 0
      %1311 = vmatpush1.bf16.msra.mxu0 0
      %1312 = vmatprep.subr.bf16.mxu0 0
      %1313 = vmatpush1.bf16.msra.mxu0 0
      %1314 = vmatprep.subr.bf16.mxu0 0
      %1315 = vmatpush1.bf16.msra.mxu0 0
      %1316 = vmatprep.subr.bf16.mxu0 0
      %1317 = vmatpush1.bf16.msra.mxu0 0
      %1318 = vmatprep.subr.bf16.mxu0 0
      %1319 = vmatpush1.bf16.msra.mxu0 0
      %1320 = vmatprep.subr.bf16.mxu0 0
      %1321 = vmatpush1.bf16.msra.mxu0 0
      %1322 = vmatprep.subr.bf16.mxu0 0
      %1323 = vmatpush1.bf16.msra.mxu0 0
      %1324 = vmatprep.subr.bf16.mxu0 0
      %1325 = vmatpush1.bf16.msra.mxu0 0
      %1326 = vmatprep.subr.bf16.mxu0 0
      %1327 = vmatpush1.bf16.msra.mxu0 0
      %1328 = vmatprep.subr.bf16.mxu0 0
      %1329 = vmatpush1.bf16.msra.mxu0 0
      %1330 = vmatprep.mubr.bf16.mxu0 0
      %1331 = vmatmul.mubr.bf16.gmra.mrb[0].mxu0 %v1284
      %v1332 = vpop.f32.mrb[0].mxu0
      %v1333 = vadd.f32 0.0, %v1332
      %v1334 = vpop.f32.mrb[0].mxu0
      %v1335 = vpop.f32.mrb[0].mxu0
      %v1336 = vadd.f32 0.0, %v1335
      %v1337 = vpop.f32.mrb[0].mxu0
      %1338 = vmatprep.mubr.bf16.mxu0 0
      %1339 = vmatmul.mubr.bf16.gmra.mrb[0].mxu0 %v1287
      %v1340 = vpop.f32.mrb[0].mxu0
      %v1341 = vadd.f32 0.0, %v1340
      %v1342 = vpop.f32.mrb[0].mxu0
      %v1343 = vpop.f32.mrb[0].mxu0
      %v1344 = vadd.f32 0.0, %v1343
      %v1345 = vpop.f32.mrb[0].mxu0
      %1346 = vmatprep.mubr.bf16.mxu0 0
      %1347 = vmatmul.mubr.bf16.gmra.mrb[0].mxu0 %v1290
      %v1348 = vpop.f32.mrb[0].mxu0
      %v1349 = vadd.f32 0.0, %v1348
      %v1350 = vpop.f32.mrb[0].mxu0
      %v1351 = vpop.f32.mrb[0].mxu0
      %v1352 = vadd.f32 0.0, %v1351
      %v1353 = vpop.f32.mrb[0].mxu0
      %1354 = vmatprep.mubr.bf16.mxu0 0
      %1355 = vmatmul.mubr.bf16.gmra.mrb[0].mxu0 %v1293
      %v1356 = vpop.f32.mrb[0].mxu0
      %v1357 = vadd.f32 0.0, %v1356
      %v1358 = vpop.f32.mrb[0].mxu0
      %v1359 = vpop.f32.mrb[0].mxu0
      %v1360 = vadd.f32 0.0, %v1359
      %v1361 = vpop.f32.mrb[0].mxu0
      %1362 = vdwg.mxu0
      %v1363 = vadd.f32 %v1242, %v1333
      %v1364 = vadd.f32 %v1243, %v1336
      %v1365 = vadd.f32 %v1244, %v1341
      %v1366 = vadd.f32 %v1245, %v1344
      %v1367 = vadd.f32 %v1246, %v1349
      %v1368 = vadd.f32 %v1247, %v1352
      %v1369 = vadd.f32 %v1248, %v1357
      %v1370 = vadd.f32 %v1249, %v1360
      %v1371 = vld [vmem:[%s1131] sm:$0xf]
      %v1372 = vld [vmem:[%s1131 + $0x4] sm:$0x1]
      %v1373 = vld [vmem:[%s1131 + $0x8] sm:$0xf]
      %v1374 = vld [vmem:[%s1131 + $0xc] sm:$0x1]
      %v1375 = vld [vmem:[%s1131 + $0x10] sm:$0xf]
      %v1376 = vld [vmem:[%s1131 + $0x14] sm:$0x1]
      %v1377 = vld [vmem:[%s1131 + $0x18] sm:$0xf]
      %v1378 = vld [vmem:[%s1131 + $0x1c] sm:$0x1]
      %v1379 = vld [vmem:[%s1131 + $0x20] sm:$0xf]
      %v1380 = vld [vmem:[%s1131 + $0x24] sm:$0x1]
      %v1381 = vld [vmem:[%s1131 + $0x28] sm:$0xf]
      %v1382 = vld [vmem:[%s1131 + $0x2c] sm:$0x1]
      %v1383 = vld [vmem:[%s1131 + $0x30] sm:$0xf]
      %v1384 = vld [vmem:[%s1131 + $0x34] sm:$0x1]
      %v1385 = vld [vmem:[%s1131 + $0x38] sm:$0xf]
      %v1386 = vld [vmem:[%s1131 + $0x3c] sm:$0x1]
      %v1388 = vshrl.u32 %v1371, 16
      %v1390 = vrot.slane %v1388, 4
      %v1391 = vshll.u32 %v1371, 16
      %v1393 = vrot.slane %v1391, 5
      %v1394 = vor.u32 %v1390, %v1393
      %v1395 = vrot.slane %v1394, 4
      %v1397 = vshll.u32 %v1372, 16
      %v1399 = vrot.slane %v1397, 5
      %v1400 = vsel %vm441, %v1395, %v1399
      %v1402 = vshrl.u32 %v1373, 16
      %v1404 = vrot.slane %v1402, 4
      %v1405 = vshll.u32 %v1373, 16
      %v1407 = vrot.slane %v1405, 5
      %v1408 = vor.u32 %v1404, %v1407
      %v1409 = vrot.slane %v1408, 4
      %v1411 = vshll.u32 %v1374, 16
      %v1413 = vrot.slane %v1411, 5
      %v1414 = vsel %vm441, %v1409, %v1413
      %v1416 = vshrl.u32 %v1375, 16
      %v1418 = vrot.slane %v1416, 4
      %v1419 = vshll.u32 %v1375, 16
      %v1421 = vrot.slane %v1419, 5
      %v1422 = vor.u32 %v1418, %v1421
      %v1423 = vrot.slane %v1422, 4
      %v1425 = vshll.u32 %v1376, 16
      %v1427 = vrot.slane %v1425, 5
      %v1428 = vsel %vm441, %v1423, %v1427
      %v1430 = vshrl.u32 %v1377, 16
      %v1432 = vrot.slane %v1430, 4
      %v1433 = vshll.u32 %v1377, 16
      %v1435 = vrot.slane %v1433, 5
      %v1436 = vor.u32 %v1432, %v1435
      %v1437 = vrot.slane %v1436, 4
      %v1439 = vshll.u32 %v1378, 16
      %v1441 = vrot.slane %v1439, 5
      %v1442 = vsel %vm441, %v1437, %v1441
      %v1444 = vshrl.u32 %v1379, 16
      %v1446 = vrot.slane %v1444, 4
      %v1447 = vshll.u32 %v1379, 16
      %v1449 = vrot.slane %v1447, 5
      %v1450 = vor.u32 %v1446, %v1449
      %v1451 = vrot.slane %v1450, 4
      %v1453 = vshll.u32 %v1380, 16
      %v1455 = vrot.slane %v1453, 5
      %v1456 = vsel %vm441, %v1451, %v1455
      %v1458 = vshrl.u32 %v1381, 16
      %v1460 = vrot.slane %v1458, 4
      %v1461 = vshll.u32 %v1381, 16
      %v1463 = vrot.slane %v1461, 5
      %v1464 = vor.u32 %v1460, %v1463
      %v1465 = vrot.slane %v1464, 4
      %v1467 = vshll.u32 %v1382, 16
      %v1469 = vrot.slane %v1467, 5
      %v1470 = vsel %vm441, %v1465, %v1469
      %v1472 = vshrl.u32 %v1383, 16
      %v1474 = vrot.slane %v1472, 4
      %v1475 = vshll.u32 %v1383, 16
      %v1477 = vrot.slane %v1475, 5
      %v1478 = vor.u32 %v1474, %v1477
      %v1479 = vrot.slane %v1478, 4
      %v1481 = vshll.u32 %v1384, 16
      %v1483 = vrot.slane %v1481, 5
      %v1484 = vsel %vm441, %v1479, %v1483
      %v1486 = vshrl.u32 %v1385, 16
      %v1488 = vrot.slane %v1486, 4
      %v1489 = vshll.u32 %v1385, 16
      %v1491 = vrot.slane %v1489, 5
      %v1492 = vor.u32 %v1488, %v1491
      %v1493 = vrot.slane %v1492, 4
      %v1495 = vshll.u32 %v1386, 16
      %v1497 = vrot.slane %v1495, 5
      %v1498 = vsel %vm441, %v1493, %v1497
      %s1499 = scalar_lea.vmem %s1, 16
      %v1500 = vld [vmem:[%s1499] sm:$0x3]
      %v1501 = vunpack.c.l.b16 %v1400
      %v1502 = vunpack.c.l.b16 %v1414
      %v1503 = vunpack.c.l.b16 %v1428
      %v1504 = vunpack.c.l.b16 %v1442
      %v1505 = vunpack.c.l.b16 %v1456
      %v1506 = vunpack.c.l.b16 %v1470
      %v1507 = vunpack.c.l.b16 %v1484
      %v1508 = vunpack.c.l.b16 %v1498
      %v1509 = vpack.c.b16 %v1502, %v1501
      %v1510 = vpack.c.b16 %v1504, %v1503
      %v1511 = vpack.c.b16 %v1506, %v1505
      %v1512 = vpack.c.b16 %v1508, %v1507
      %v1514 = vsel %vm241, %v1509, 0
      %v1517 = vsel %vm241, %v1510, 0
      %v1520 = vsel %vm241, %v1511, 0
      %v1523 = vsel %vm241, %v1512, 0
      %v1526 = vsel %vm254, %v1500, 0
      %1528 = vmatprep.subr.bf16.mxu0 0
      %1529 = vmatpush1.bf16.msra.mxu0 %v1526
      %1530 = vmatprep.subr.bf16.mxu0 0
      %1531 = vmatpush1.bf16.msra.mxu0 0
      %1532 = vmatprep.subr.bf16.mxu0 0
      %1533 = vmatpush1.bf16.msra.mxu0 0
      %1534 = vmatprep.subr.bf16.mxu0 0
      %1535 = vmatpush1.bf16.msra.mxu0 0
      %1536 = vmatprep.subr.bf16.mxu0 0
      %1537 = vmatpush1.bf16.msra.mxu0 0
      %1538 = vmatprep.subr.bf16.mxu0 0
      %1539 = vmatpush1.bf16.msra.mxu0 0
      %1540 = vmatprep.subr.bf16.mxu0 0
      %1541 = vmatpush1.bf16.msra.mxu0 0
      %1542 = vmatprep.subr.bf16.mxu0 0
      %1543 = vmatpush1.bf16.msra.mxu0 0
      %1544 = vmatprep.subr.bf16.mxu0 0
      %1545 = vmatpush1.bf16.msra.mxu0 0
      %1546 = vmatprep.subr.bf16.mxu0 0
      %1547 = vmatpush1.bf16.msra.mxu0 0
      %1548 = vmatprep.subr.bf16.mxu0 0
      %1549 = vmatpush1.bf16.msra.mxu0 0
      %1550 = vmatprep.subr.bf16.mxu0 0
      %1551 = vmatpush1.bf16.msra.mxu0 0
      %1552 = vmatprep.subr.bf16.mxu0 0
      %1553 = vmatpush1.bf16.msra.mxu0 0
      %1554 = vmatprep.subr.bf16.mxu0 0
      %1555 = vmatpush1.bf16.msra.mxu0 0
      %1556 = vmatprep.subr.bf16.mxu0 0
      %1557 = vmatpush1.bf16.msra.mxu0 0
      %1558 = vmatprep.subr.bf16.mxu0 0
      %1559 = vmatpush1.bf16.msra.mxu0 0
      %1560 = vmatprep.mubr.bf16.mxu0 0
      %1561 = vmatmul.mubr.bf16.gmra.mrb[0].mxu0 %v1514
      %v1562 = vpop.f32.mrb[0].mxu0
      %v1563 = vadd.f32 0.0, %v1562
      %v1564 = vpop.f32.mrb[0].mxu0
      %v1565 = vpop.f32.mrb[0].mxu0
      %v1566 = vadd.f32 0.0, %v1565
      %v1567 = vpop.f32.mrb[0].mxu0
      %1568 = vmatprep.mubr.bf16.mxu0 0
      %1569 = vmatmul.mubr.bf16.gmra.mrb[0].mxu0 %v1517
      %v1570 = vpop.f32.mrb[0].mxu0
      %v1571 = vadd.f32 0.0, %v1570
      %v1572 = vpop.f32.mrb[0].mxu0
      %v1573 = vpop.f32.mrb[0].mxu0
      %v1574 = vadd.f32 0.0, %v1573
      %v1575 = vpop.f32.mrb[0].mxu0
      %1576 = vmatprep.mubr.bf16.mxu0 0
      %1577 = vmatmul.mubr.bf16.gmra.mrb[0].mxu0 %v1520
      %v1578 = vpop.f32.mrb[0].mxu0
      %v1579 = vadd.f32 0.0, %v1578
      %v1580 = vpop.f32.mrb[0].mxu0
      %v1581 = vpop.f32.mrb[0].mxu0
      %v1582 = vadd.f32 0.0, %v1581
      %v1583 = vpop.f32.mrb[0].mxu0
      %1584 = vmatprep.mubr.bf16.mxu0 0
      %1585 = vmatmul.mubr.bf16.gmra.mrb[0].mxu0 %v1523
      %v1586 = vpop.f32.mrb[0].mxu0
      %v1587 = vadd.f32 0.0, %v1586
      %v1588 = vpop.f32.mrb[0].mxu0
      %v1589 = vpop.f32.mrb[0].mxu0
      %v1590 = vadd.f32 0.0, %v1589
      %v1591 = vpop.f32.mrb[0].mxu0
      %1592 = vdwg.mxu0
      %v1593 = vadd.f32 %v1363, %v1563
      %v1594 = vadd.f32 %v1364, %v1566
      %v1595 = vadd.f32 %v1365, %v1571
      %v1596 = vadd.f32 %v1366, %v1574
      %v1597 = vadd.f32 %v1367, %v1579
      %v1598 = vadd.f32 %v1368, %v1582
      %v1599 = vadd.f32 %v1369, %v1587
      %v1600 = vadd.f32 %v1370, %v1590
      %v1601 = vld [vmem:[%s2] sm:$0x1]
      %v1603 = vlaneseq
      %v1604 = vshrl.u32 %v1603, 7
      %v1605 = vsub.s32 0, %v1604
      %v1606 = vrot.slane %v1601, %v1605
      %v1608 = vadd.f32 %v1593, %v1606
      %v1609 = vadd.f32 %v1594, %v1606
      %v1610 = vadd.f32 %v1595, %v1606
      %v1611 = vadd.f32 %v1596, %v1606
      %v1612 = vadd.f32 %v1597, %v1606
      %v1613 = vadd.f32 %v1598, %v1606
      %v1614 = vadd.f32 %v1599, %v1606
      %v1615 = vadd.f32 %v1600, %v1606
      %v1616 = vmul.f32 %v1608, 0.5
      %v1617 = vmul.f32 %v1609, 0.5
      %v1618 = vmul.f32 %v1610, 0.5
      %v1619 = vmul.f32 %v1611, 0.5
      %v1620 = vmul.f32 %v1612, 0.5
      %v1621 = vmul.f32 %v1613, 0.5
      %v1622 = vmul.f32 %v1614, 0.5
      %v1623 = vmul.f32 %v1615, 0.5
      %v1624 = vmul.f32 %v1608, 0.70710677
      %v1625 = vmul.f32 %v1609, 0.70710677
      %v1626 = vmul.f32 %v1610, 0.70710677
      %v1627 = vmul.f32 %v1611, 0.70710677
      %v1628 = vmul.f32 %v1612, 0.70710677
      %v1629 = vmul.f32 %v1613, 0.70710677
      %v1630 = vmul.f32 %v1614, 0.70710677
      %v1631 = vmul.f32 %v1615, 0.70710677
      %v1632 = verf.f32.pop %v1624
      %v1633 = verf.f32.pop %v1625
      %v1634 = verf.f32.pop %v1626
      %v1635 = verf.f32.pop %v1627
      %v1636 = verf.f32.pop %v1628
      %v1637 = verf.f32.pop %v1629
      %v1638 = verf.f32.pop %v1630
      %v1639 = verf.f32.pop %v1631
      %v1640 = vadd.f32 %v1632, 1.0
      %v1641 = vadd.f32 %v1633, 1.0
      %v1642 = vadd.f32 %v1634, 1.0
      %v1643 = vadd.f32 %v1635, 1.0
      %v1644 = vadd.f32 %v1636, 1.0
      %v1645 = vadd.f32 %v1637, 1.0
      %v1646 = vadd.f32 %v1638, 1.0
      %v1647 = vadd.f32 %v1639, 1.0
      %v1648 = vmul.f32 %v1616, %v1640
      %v1649 = vmul.f32 %v1617, %v1641
      %v1650 = vmul.f32 %v1618, %v1642
      %v1651 = vmul.f32 %v1619, %v1643
      %v1652 = vmul.f32 %v1620, %v1644
      %v1653 = vmul.f32 %v1621, %v1645
      %v1654 = vmul.f32 %v1622, %v1646
      %v1655 = vmul.f32 %v1623, %v1647
      %v1656 = vpack.c.bf16 %v1648, %v1648
      %v1657 = vpack.c.bf16 %v1649, %v1649
      %v1658 = vpack.c.bf16 %v1650, %v1650
      %v1659 = vpack.c.bf16 %v1651, %v1651
      %v1660 = vpack.c.bf16 %v1652, %v1652
      %v1661 = vpack.c.bf16 %v1653, %v1653
      %v1662 = vpack.c.bf16 %v1654, %v1654
      %v1663 = vpack.c.bf16 %v1655, %v1655
      %vm1664 = vcmask 27648
      %1665 = vst.msk [vmem:[%s192] sm:$0xf] %vm1664, %v1656
      %1666 = vst.msk [vmem:[%s192 + $0x4] sm:$0xf] %vm1664, %v1657
      %1667 = vst.msk [vmem:[%s192 + $0x8] sm:$0xf] %vm1664, %v1658
      %1668 = vst.msk [vmem:[%s192 + $0xc] sm:$0xf] %vm1664, %v1659
      %1669 = vst.msk [vmem:[%s192 + $0x10] sm:$0xf] %vm1664, %v1660
      %1670 = vst.msk [vmem:[%s192 + $0x14] sm:$0xf] %vm1664, %v1661
      %1671 = vst.msk [vmem:[%s192 + $0x18] sm:$0xf] %vm1664, %v1662
      %1672 = vst.msk [vmem:[%s192 + $0x1c] sm:$0xf] %vm1664, %v1663
      %s1673 = smul.u32 8, %s19
      %p1674 = scmp.lt.s32.totalorder %s18, 1
      %s1675 = scalar_select %p1674, %s18, 1
      %p1676 = scmp.lt.s32.totalorder %s1673, 7
      %s1677 = scalar_select %p1676, %s1673, 7
      %s1678 = smul.addr %s1675, 8
      %s1679 = sadd.s32 %s1677, %s1678
      %s1680 = smul.addr %s1679, 4
      %s1681 = scalar_lea.vmem %s3, %s1680
      // Predicated region
      $region33: #{_fpn_p6p7_forward.2} parent=31 // pred_check
        %p1682 = pneg %p114
      $region34: #{_fpn_p6p7_forward.2} parent=31 // pred_check_branch
        %1684 = sbr.rel (%p1682) target = $region36
      $region35: #{_fpn_p6p7_forward.2} parent=31 // pred_region
        %s1685 = smul.u32 8, %s19
      $region36: #{_fpn_p6p7_forward.2} parent=31 // pred_fallthru
        _
    $region32: #{_fpn_p6p7_forward.2} parent=5 // pred_fallthru
      _
    %p1686 = scmp.le.s32.totalorder 2, %s9
    // Predicated region
    $region37: #{_fpn_p6p7_forward.2} parent=5 // pred_check
      %p1687 = pneg %p1686
    $region38: #{_fpn_p6p7_forward.2} parent=5 // pred_check_branch
      %1689 = sbr.rel (%p1687) target = $region40
    $region39: #{_fpn_p6p7_forward.2} parent=5 // pred_region
      %s1690 = ssub.s32 %s9, 2
      // Predicated region
      $region41: #{_fpn_p6p7_forward.2} parent=39 // pred_check
        %p1691 = pneg %p120
      $region42: #{_fpn_p6p7_forward.2} parent=39 // pred_check_branch
        %1693 = sbr.rel (%p1691) target = $region44
      $region43: #{_fpn_p6p7_forward.2} parent=39 // pred_region
        %s1694 = smul.u32 8, %s21
        %p1695 = scmp.lt.s32.totalorder %s20, 1
        %s1696 = scalar_select %p1695, %s20, 1
        %p1697 = scmp.lt.s32.totalorder %s1694, 7
        %s1698 = scalar_select %p1697, %s1694, 7
        %s1699 = smul.addr %s1696, 8
        %s1700 = sadd.s32 %s1698, %s1699
        %s1701 = smul.addr %s1700, 4
        %s1702 = scalar_lea.vmem %s3, %s1701
      $region44: #{_fpn_p6p7_forward.2} parent=39 // pred_fallthru
        _
    $region40: #{_fpn_p6p7_forward.2} parent=5 // pred_fallthru
      _
  $region6: #{_fpn_p6p7_forward.2} parent=0 // loop_footer
    %s13 = sadd.s32 1, %s9
  $region7: #{_fpn_p6p7_forward.2} parent=0 // loop_footer_branch
    %8 = sbr.rel target = $region3
  $region8: #{_fpn_p6p7_forward.2} parent=0 // loop_exit
    _

</llo_original>
